<compile_context>
chip_gen: v6e
topology: v6e:2x2x1
jax: 0.10.0
libtpu: 0.0.40
codegen_flags: <defaults>
</compile_context>

<pallas_src>
import numpy as np

import jax
import jax.numpy as jnp
from jax.experimental import pallas as pl
from jax.experimental.pallas import tpu as pltpu


def _round_up(n, m):
    return ((n + m - 1) // m) * m


# ----------------------------------------------------------------------------
# Fused Pallas kernel: one batch tile (Bt examples) per grid step.
# ----------------------------------------------------------------------------
def _fused_forward_kernel(col1_ref, w1_ref, b1_ref,
                          s2_ref, w2_ref, b2_ref,
                          s3_ref, w3_ref, b3_ref,
                          wl_ref, bl_ref, o_ref):
    f32 = jnp.float32
    bf16 = jnp.bfloat16
    n = col1_ref.shape[0] // 4          # Bt*9 pooled spatial positions / tile

    # conv1 (3->16, k=2) + ReLU.  im2col was done in the wrapper, so this is a
    # single (4*Bt*9, 12) @ (12, 16) MXU matmul.  Rows are ordered
    # (pool-window offset w, batch-in-tile, pi, pj).
    y1 = jnp.dot(col1_ref[...], w1_ref[...], preferred_element_type=f32)
    y1 = jnp.maximum(y1 + b1_ref[...], 0.0)

    # MaxPool2d(2): elementwise max over the four 8-aligned row blocks (one per
    # in-window offset).  Result rows ordered (batch-in-tile, pi, pj).
    yp = jnp.maximum(jnp.maximum(y1[0:n], y1[n:2 * n]),
                     jnp.maximum(y1[2 * n:3 * n], y1[3 * n:4 * n]))

    def conv_relu(act, s_ref, wcat_ref, b_ref, cout):
        # 2x2 VALID conv:  H = act @ [W_0|W_1|W_2|W_3]  (one wide, lane-filling
        # bf16 MXU matmul), then acc = sum_t S_t @ H[:, t*cout:(t+1)*cout] with
        # constant 0/1 row-selection matrices -> no gathers / strided slices.
        h = jnp.dot(act.astype(bf16), wcat_ref[...], preferred_element_type=f32)
        acc = None
        for t in range(4):                           # static, unrolled taps
            ht = h[:, t * cout:(t + 1) * cout].astype(bf16)
            c = jnp.dot(s_ref[t], ht, preferred_element_type=f32)
            acc = c if acc is None else acc + c
        return jnp.maximum(acc + b_ref[...], 0.0)    # bias/ReLU kept in f32

    # conv2 (16->32, k=2) + ReLU        -> (Bt*4, 32)
    y2 = conv_relu(yp, s2_ref, w2_ref, b2_ref, 32)
    # conv3 (32->64, k=2) + ReLU        -> (Bt, 64)  (1x1 spatial == flatten)
    y3 = conv_relu(y2, s3_ref, w3_ref, b3_ref, 64)

    # Linear(64, hidden), hidden lane-padded to 128 -> unmasked (Bt,128) store.
    out = jnp.dot(y3.astype(bf16), wl_ref[...], preferred_element_type=f32)
    o_ref[...] = (out + bl_ref[...]).astype(o_ref.dtype)


# ----------------------------------------------------------------------------
# Tile-invariant 0/1 selection matrices (O(Bt) host work, built once).
# ----------------------------------------------------------------------------
def _build_selection_mats(bt):
    """conv2/conv3 tap-selection matrices for ONE batch tile of `bt` examples.

    Block-diagonal over the batch element -> padded batch rows can never leak
    into real rows (correctness invariant relied on by the wrapper slice)."""
    s2 = np.zeros((4, 4 * bt, 9 * bt), np.float32)   # conv2: 3x3 -> 2x2
    s3 = np.zeros((4, bt, 4 * bt), np.float32)       # conv3: 2x2 -> 1x1
    for b in range(bt):
        for di in range(2):
            for dj in range(2):
                t = di * 2 + dj
                for oi in range(2):
                    for oj in range(2):
                        s2[t, b * 4 + oi * 2 + oj,
                           b * 9 + (oi + di) * 3 + (oj + dj)] = 1.0
                s3[t, b, b * 4 + di * 2 + dj] = 1.0
    return s2, s3


# ----------------------------------------------------------------------------
# Wrapper-side conv1 im2col (plain XLA ops; replaces the O(B^2) s1 matrix).
# ----------------------------------------------------------------------------
def _conv1_im2col(x, b_pad, bt):
    """Returns (nb*4*bt*9, 12) bf16 rows ordered (tile, window-offset w=wi*2+wj,
    batch-in-tile, pi, pj).  The 12 columns are the 2x2x3 patch flattened in
    (kh, kw, cin) order to match w1.reshape(12, 16).  The torch
    transpose(x, 1, 3) is folded in (NHWC view: xt[b,i,j,c] = x[b,j,i,c])."""
    b = x.shape[0]
    x = jnp.pad(x.astype(jnp.float32),
                ((0, b_pad - b), (0, 0), (0, 0), (0, 0)))
    xt = jnp.transpose(x, (0, 2, 1, 3))                        # (Bp,7,7,3)
    p = jnp.stack([xt[:, di:di + 6, dj:dj + 6, :]
                   for di in range(2) for dj in range(2)], axis=3)
    p = p.reshape(b_pad, 6, 6, 12)                             # (b,i,j,patch)
    p = p.reshape(b_pad, 3, 2, 3, 2, 12)                       # i=(pi,wi) j=(pj,wj)
    p = jnp.transpose(p, (2, 4, 0, 1, 3, 5))                   # (wi,wj,b,pi,pj,12)
    nb = b_pad // bt
    p = p.reshape(4, nb, bt, 9, 12)
    p = jnp.transpose(p, (1, 0, 2, 3, 4))                      # (tile,w,bt,9,12)
    return p.reshape(nb * 4 * bt * 9, 12).astype(jnp.bfloat16)


# ----------------------------------------------------------------------------
# Forward builder: all layout prep hoisted out of the hot path.
# ----------------------------------------------------------------------------
def make_forward(params, bt=8):
    """Jitted MiniGridCNN forward.  `bt` = per-grid-step batch tile (mult. of 8).
    Per-tile VMEM: ~80 KB of blocks (double-buffered) -> fits every chip's VMEM
    with huge margin (v7x 64 MiB physical / 32 MiB default scoped)."""
    assert bt % 8 == 0, "batch tile must keep sublane dims 8-aligned"
    hidden = params["wl"].shape[1]
    h_pad = _round_up(hidden, 128)
    rows1 = 4 * bt * 9                               # conv1 rows per tile

    s2_np, s3_np = _build_selection_mats(bt)

    def wcat(w):   # HWIO (2,2,cin,cout) -> (cin, 4*cout), taps concat on lanes
        k = np.asarray(w, np.float32)
        cin, cout = k.shape[2], k.shape[3]
        return np.transpose(k.reshape(4, cin, cout), (1, 0, 2)).reshape(cin, 4 * cout)

    # Constants: selection matrices are exact in bf16; weights round ~1e-3 rel.
    consts = (
        jnp.asarray(np.asarray(params["w1"], np.float32).reshape(12, 16),
                    jnp.bfloat16),
        jnp.asarray(params["b1"], jnp.float32).reshape(1, 16),
        jnp.asarray(s2_np, jnp.bfloat16),
        jnp.asarray(wcat(params["w2"]), jnp.bfloat16),
        jnp.asarray(params["b2"], jnp.float32).reshape(1, 32),
        jnp.asarray(s3_np, jnp.bfloat16),
        jnp.asarray(wcat(params["w3"]), jnp.bfloat16),
        jnp.asarray(params["b3"], jnp.float32).reshape(1, 64),
        jnp.pad(jnp.asarray(params["wl"], jnp.float32),
                ((0, 0), (0, h_pad - hidden))).astype(jnp.bfloat16),
        jnp.pad(jnp.asarray(params["bl"], jnp.float32).reshape(1, hidden),
                ((0, 0), (0, h_pad - hidden))),
    )
    const_bytes = sum(int(np.prod(c.shape)) * c.dtype.itemsize for c in consts)

    @jax.jit
    def forward(x):
        b = x.shape[0]
        b_pad = _round_up(max(b, bt), bt)
        nb = b_pad // bt

        col1 = _conv1_im2col(x, b_pad, bt)           # (nb*rows1, 12) bf16

        # Constants: constant index_map -> fetched once, resident across grid.
        const_specs = [
            pl.BlockSpec((12, 16), lambda g: (0, 0)),
            pl.BlockSpec((1, 16), lambda g: (0, 0)),
            pl.BlockSpec((4, 4 * bt, 9 * bt), lambda g: (0, 0, 0)),
            pl.BlockSpec((16, 128), lambda g: (0, 0)),
            pl.BlockSpec((1, 32), lambda g: (0, 0)),
            pl.BlockSpec((4, bt, 4 * bt), lambda g: (0, 0, 0)),
            pl.BlockSpec((32, 256), lambda g: (0, 0)),
            pl.BlockSpec((1, 64), lambda g: (0, 0)),
            pl.BlockSpec((64, h_pad), lambda g: (0, 0)),
            pl.BlockSpec((1, h_pad), lambda g: (0, 0)),
        ]
        in_specs = [pl.BlockSpec((rows1, 12), lambda g: (g, 0))] + const_specs
        out_spec = pl.BlockSpec((bt, h_pad), lambda g: (g, 0))  # lane-dense slab

        # VMEM budget from actual block bytes (streamed blocks double-buffered)
        # + headroom for in-kernel temporaries (<200 KB).
        stream_bytes = rows1 * 12 * 2 + bt * h_pad * 4
        vmem_limit = int(2 * (2 * stream_bytes + const_bytes)) + (2 << 20)

        flops_tile = 2 * (rows1 * 12 * 16
                          + 9 * bt * 16 * 128 + 4 * 4 * bt * 9 * bt * 32
                          + 4 * bt * 32 * 256 + 4 * bt * 4 * bt * 64
                          + bt * 64 * h_pad)
        cost = pl.CostEstimate(flops=nb * flops_tile, transcendentals=0,
                               bytes_accessed=nb * stream_bytes + const_bytes)

        out = pl.pallas_call(
            _fused_forward_kernel,
            out_shape=jax.ShapeDtypeStruct((b_pad, h_pad), jnp.float32),
            grid=(nb,),
            in_specs=in_specs,
            out_specs=out_spec,
            compiler_params=pltpu.CompilerParams(
                dimension_semantics=("parallel",),   # v7x: 2 TCs split tiles
                vmem_limit_bytes=vmem_limit),
            cost_estimate=cost,
        )(col1, *consts)

        return out[:b, :hidden]

    return forward


# ----------------------------------------------------------------------------
# Pure-JAX f32 reference (replicates the PyTorch forward) for correctness.
# ----------------------------------------------------------------------------
def reference_forward(x, params):
    xt = jnp.transpose(x, (0, 2, 1, 3))              # torch.transpose(x,1,3)
    dn = ("NHWC", "HWIO", "NHWC")

    def conv_relu(z, w, b):
        y = jax.lax.conv_general_dilated(z, w, (1, 1), "VALID",
                                         dimension_numbers=dn)
        return jax.nn.relu(y + b)

    y = conv_relu(xt, params["w1"], params["b1"])
    y = jax.lax.reduce_window(y, -jnp.inf, jax.lax.max,
                              (1, 2, 2, 1), (1, 2, 2, 1), "VALID")
    y = conv_relu(y, params["w2"], params["b2"])
    y = conv_relu(y, params["w3"], params["b3"])
    y = y.reshape(y.shape[0], -1)
    return y @ params["wl"] + params["bl"]


# ----------------------------------------------------------------------------
# Deterministic parameter init (shapes from MiniGridCNN.__init__, HWIO layout)
# ----------------------------------------------------------------------------
def init_params(key, hidden):
    ks = jax.random.split(key, 8)
    scale = 0.1
    return {
        "w1": scale * jax.random.normal(ks[0], (2, 2, 3, 16), jnp.float32),
        "b1": scale * jax.random.normal(ks[1], (16,), jnp.float32),
        "w2": scale * jax.random.normal(ks[2], (2, 2, 16, 32), jnp.float32),
        "b2": scale * jax.random.normal(ks[3], (32,), jnp.float32),
        "w3": scale * jax.random.normal(ks[4], (2, 2, 32, 64), jnp.float32),
        "b3": scale * jax.random.normal(ks[5], (64,), jnp.float32),
        "wl": scale * jax.random.normal(ks[6], (64, hidden), jnp.float32),
        "bl": scale * jax.random.normal(ks[7], (hidden,), jnp.float32),
    }


if __name__ == "__main__":
    B, HID = 2, 32
    key = jax.random.PRNGKey(0)
    kx, kp = jax.random.split(key)
    x = jax.random.uniform(kx, (B, 7, 7, 3), dtype=jnp.float32)
    params = init_params(kp, HID)

    forward = make_forward(params, bt=8)
    out = jax.block_until_ready(forward(x))

    ref = reference_forward(x, params)
    assert out.shape == (B, HID), out.shape
    # bf16 constants / MXU operands (per perf review) -> allow ~1e-2 drift vs
    # the f32 reference; a structural bug would be O(0.1-1).
    assert jnp.allclose(out, ref, atol=5e-2, rtol=5e-2), (
        float(jnp.max(jnp.abs(out - ref))))
    print("KERNEL_OK")
</pallas_src>

<mosaic_0001>
module attributes {stable_mosaic.version = 11 : i64} {
  func.func @_fused_forward_kernel(%arg0: i32, %arg1: memref<288x12xbf16, #tpu.memory_space<vmem>>, %arg2: memref<12x16xbf16, #tpu.memory_space<vmem>>, %arg3: memref<1x16xf32, #tpu.memory_space<vmem>>, %arg4: memref<4x32x72xbf16, #tpu.memory_space<vmem>>, %arg5: memref<16x128xbf16, #tpu.memory_space<vmem>>, %arg6: memref<1x32xf32, #tpu.memory_space<vmem>>, %arg7: memref<4x8x32xbf16, #tpu.memory_space<vmem>>, %arg8: memref<32x256xbf16, #tpu.memory_space<vmem>>, %arg9: memref<1x64xf32, #tpu.memory_space<vmem>>, %arg10: memref<64x128xbf16, #tpu.memory_space<vmem>>, %arg11: memref<1x128xf32, #tpu.memory_space<vmem>>, %arg12: memref<8x128xf32, #tpu.memory_space<vmem>>) attributes {dimension_semantics = [#tpu.dimension_semantics<parallel>], iteration_bounds = array<i64: 1>, scalar_prefetch = 0 : i64, scratch_operands = 0 : i64, tpu.core_type = #tpu.core_type<tc>, window_params = [{transform_indices = @transform_0, window_bounds = array<i64: 288, 12>}, {pipeline_mode = #tpu.pipeline_mode<synchronous>, transform_indices = @transform_1, window_bounds = array<i64: 12, 16>}, {pipeline_mode = #tpu.pipeline_mode<synchronous>, transform_indices = @transform_2, window_bounds = array<i64: 1, 16>}, {pipeline_mode = #tpu.pipeline_mode<synchronous>, transform_indices = @transform_3, window_bounds = array<i64: 4, 32, 72>}, {pipeline_mode = #tpu.pipeline_mode<synchronous>, transform_indices = @transform_4, window_bounds = array<i64: 16, 128>}, {pipeline_mode = #tpu.pipeline_mode<synchronous>, transform_indices = @transform_5, window_bounds = array<i64: 1, 32>}, {pipeline_mode = #tpu.pipeline_mode<synchronous>, transform_indices = @transform_6, window_bounds = array<i64: 4, 8, 32>}, {pipeline_mode = #tpu.pipeline_mode<synchronous>, transform_indices = @transform_7, window_bounds = array<i64: 32, 256>}, {pipeline_mode = #tpu.pipeline_mode<synchronous>, transform_indices = @transform_8, window_bounds = array<i64: 1, 64>}, {pipeline_mode = #tpu.pipeline_mode<synchronous>, transform_indices = @transform_9, window_bounds = array<i64: 64, 128>}, {pipeline_mode = #tpu.pipeline_mode<synchronous>, transform_indices = @transform_10, window_bounds = array<i64: 1, 128>}, {transform_indices = @transform_11, window_bounds = array<i64: 8, 128>}]} {
    %c0 = arith.constant 0 : index
    %c0_0 = arith.constant 0 : index
    %0 = vector.load %arg1[%c0, %c0_0] : memref<288x12xbf16, #tpu.memory_space<vmem>>, vector<288x12xbf16>
    %c0_1 = arith.constant 0 : index
    %c0_2 = arith.constant 0 : index
    %1 = vector.load %arg2[%c0_1, %c0_2] : memref<12x16xbf16, #tpu.memory_space<vmem>>, vector<12x16xbf16>
    %cst = arith.constant dense<0.000000e+00> : vector<288x16xf32>
    %2 = tpu.matmul %0, %1, %cst {dimension_numbers = #tpu.dot_dimension_numbers<[1], [0], [0], [1], [0, 0, 1, 1], [], []>} : vector<288x12xbf16>, vector<12x16xbf16>, vector<288x16xf32> -> vector<288x16xf32>
    %c0_3 = arith.constant 0 : index
    %c0_4 = arith.constant 0 : index
    %3 = vector.load %arg3[%c0_3, %c0_4] : memref<1x16xf32, #tpu.memory_space<vmem>>, vector<1x16xf32>
    %4 = vector.broadcast %3 : vector<1x16xf32> to vector<288x16xf32>
    %5 = arith.addf %2, %4 : vector<288x16xf32>
    %cst_5 = arith.constant 0.000000e+00 : f32
    %6 = vector.broadcast %cst_5 : f32 to vector<288x16xf32>
    %7 = arith.maximumf %5, %6 : vector<288x16xf32>
    %8 = vector.extract_strided_slice %7 {offsets = [0, 0], sizes = [72, 16], strides = [1, 1]} : vector<288x16xf32> to vector<72x16xf32>
    %9 = vector.extract_strided_slice %7 {offsets = [72, 0], sizes = [72, 16], strides = [1, 1]} : vector<288x16xf32> to vector<72x16xf32>
    %10 = arith.maximumf %8, %9 : vector<72x16xf32>
    %11 = vector.extract_strided_slice %7 {offsets = [144, 0], sizes = [72, 16], strides = [1, 1]} : vector<288x16xf32> to vector<72x16xf32>
    %12 = vector.extract_strided_slice %7 {offsets = [216, 0], sizes = [72, 16], strides = [1, 1]} : vector<288x16xf32> to vector<72x16xf32>
    %13 = arith.maximumf %11, %12 : vector<72x16xf32>
    %14 = arith.maximumf %10, %13 : vector<72x16xf32>
    %15 = arith.truncf %14 : vector<72x16xf32> to vector<72x16xbf16>
    %c0_6 = arith.constant 0 : index
    %c0_7 = arith.constant 0 : index
    %16 = vector.load %arg5[%c0_6, %c0_7] : memref<16x128xbf16, #tpu.memory_space<vmem>>, vector<16x128xbf16>
    %cst_8 = arith.constant dense<0.000000e+00> : vector<72x128xf32>
    %17 = tpu.matmul %15, %16, %cst_8 {dimension_numbers = #tpu.dot_dimension_numbers<[1], [0], [0], [1], [0, 0, 1, 1], [], []>} : vector<72x16xbf16>, vector<16x128xbf16>, vector<72x128xf32> -> vector<72x128xf32>
    %18 = vector.extract_strided_slice %17 {offsets = [0, 0], sizes = [72, 32], strides = [1, 1]} : vector<72x128xf32> to vector<72x32xf32>
    %19 = arith.truncf %18 : vector<72x32xf32> to vector<72x32xbf16>
    %c0_9 = arith.constant 0 : index
    %c0_10 = arith.constant 0 : index
    %c0_11 = arith.constant 0 : index
    %20 = vector.load %arg4[%c0_9, %c0_10, %c0_11] : memref<4x32x72xbf16, #tpu.memory_space<vmem>>, vector<1x32x72xbf16>
    %21 = vector.shape_cast %20 : vector<1x32x72xbf16> to vector<32x72xbf16>
    %cst_12 = arith.constant dense<0.000000e+00> : vector<32x32xf32>
    %22 = tpu.matmul %21, %19, %cst_12 {dimension_numbers = #tpu.dot_dimension_numbers<[1], [0], [0], [1], [0, 0, 1, 1], [], []>} : vector<32x72xbf16>, vector<72x32xbf16>, vector<32x32xf32> -> vector<32x32xf32>
    %23 = vector.extract_strided_slice %17 {offsets = [0, 32], sizes = [72, 32], strides = [1, 1]} : vector<72x128xf32> to vector<72x32xf32>
    %24 = arith.truncf %23 : vector<72x32xf32> to vector<72x32xbf16>
    %c1 = arith.constant 1 : index
    %c0_13 = arith.constant 0 : index
    %c0_14 = arith.constant 0 : index
    %25 = vector.load %arg4[%c1, %c0_13, %c0_14] : memref<4x32x72xbf16, #tpu.memory_space<vmem>>, vector<1x32x72xbf16>
    %26 = vector.shape_cast %25 : vector<1x32x72xbf16> to vector<32x72xbf16>
    %cst_15 = arith.constant dense<0.000000e+00> : vector<32x32xf32>
    %27 = tpu.matmul %26, %24, %cst_15 {dimension_numbers = #tpu.dot_dimension_numbers<[1], [0], [0], [1], [0, 0, 1, 1], [], []>} : vector<32x72xbf16>, vector<72x32xbf16>, vector<32x32xf32> -> vector<32x32xf32>
    %28 = arith.addf %22, %27 : vector<32x32xf32>
    %29 = vector.extract_strided_slice %17 {offsets = [0, 64], sizes = [72, 32], strides = [1, 1]} : vector<72x128xf32> to vector<72x32xf32>
    %30 = arith.truncf %29 : vector<72x32xf32> to vector<72x32xbf16>
    %c2 = arith.constant 2 : index
    %c0_16 = arith.constant 0 : index
    %c0_17 = arith.constant 0 : index
    %31 = vector.load %arg4[%c2, %c0_16, %c0_17] : memref<4x32x72xbf16, #tpu.memory_space<vmem>>, vector<1x32x72xbf16>
    %32 = vector.shape_cast %31 : vector<1x32x72xbf16> to vector<32x72xbf16>
    %cst_18 = arith.constant dense<0.000000e+00> : vector<32x32xf32>
    %33 = tpu.matmul %32, %30, %cst_18 {dimension_numbers = #tpu.dot_dimension_numbers<[1], [0], [0], [1], [0, 0, 1, 1], [], []>} : vector<32x72xbf16>, vector<72x32xbf16>, vector<32x32xf32> -> vector<32x32xf32>
    %34 = arith.addf %28, %33 : vector<32x32xf32>
    %35 = vector.extract_strided_slice %17 {offsets = [0, 96], sizes = [72, 32], strides = [1, 1]} : vector<72x128xf32> to vector<72x32xf32>
    %36 = arith.truncf %35 : vector<72x32xf32> to vector<72x32xbf16>
    %c3 = arith.constant 3 : index
    %c0_19 = arith.constant 0 : index
    %c0_20 = arith.constant 0 : index
    %37 = vector.load %arg4[%c3, %c0_19, %c0_20] : memref<4x32x72xbf16, #tpu.memory_space<vmem>>, vector<1x32x72xbf16>
    %38 = vector.shape_cast %37 : vector<1x32x72xbf16> to vector<32x72xbf16>
    %cst_21 = arith.constant dense<0.000000e+00> : vector<32x32xf32>
    %39 = tpu.matmul %38, %36, %cst_21 {dimension_numbers = #tpu.dot_dimension_numbers<[1], [0], [0], [1], [0, 0, 1, 1], [], []>} : vector<32x72xbf16>, vector<72x32xbf16>, vector<32x32xf32> -> vector<32x32xf32>
    %40 = arith.addf %34, %39 : vector<32x32xf32>
    %c0_22 = arith.constant 0 : index
    %c0_23 = arith.constant 0 : index
    %41 = vector.load %arg6[%c0_22, %c0_23] : memref<1x32xf32, #tpu.memory_space<vmem>>, vector<1x32xf32>
    %42 = vector.broadcast %41 : vector<1x32xf32> to vector<32x32xf32>
    %43 = arith.addf %40, %42 : vector<32x32xf32>
    %cst_24 = arith.constant 0.000000e+00 : f32
    %44 = vector.broadcast %cst_24 : f32 to vector<32x32xf32>
    %45 = arith.maximumf %43, %44 : vector<32x32xf32>
    %46 = arith.truncf %45 : vector<32x32xf32> to vector<32x32xbf16>
    %c0_25 = arith.constant 0 : index
    %c0_26 = arith.constant 0 : index
    %47 = vector.load %arg8[%c0_25, %c0_26] : memref<32x256xbf16, #tpu.memory_space<vmem>>, vector<32x256xbf16>
    %cst_27 = arith.constant dense<0.000000e+00> : vector<32x256xf32>
    %48 = tpu.matmul %46, %47, %cst_27 {dimension_numbers = #tpu.dot_dimension_numbers<[1], [0], [0], [1], [0, 0, 1, 1], [], []>} : vector<32x32xbf16>, vector<32x256xbf16>, vector<32x256xf32> -> vector<32x256xf32>
    %49 = vector.extract_strided_slice %48 {offsets = [0, 0], sizes = [32, 64], strides = [1, 1]} : vector<32x256xf32> to vector<32x64xf32>
    %50 = arith.truncf %49 : vector<32x64xf32> to vector<32x64xbf16>
    %c0_28 = arith.constant 0 : index
    %c0_29 = arith.constant 0 : index
    %c0_30 = arith.constant 0 : index
    %51 = vector.load %arg7[%c0_28, %c0_29, %c0_30] : memref<4x8x32xbf16, #tpu.memory_space<vmem>>, vector<1x8x32xbf16>
    %52 = vector.shape_cast %51 : vector<1x8x32xbf16> to vector<8x32xbf16>
    %cst_31 = arith.constant dense<0.000000e+00> : vector<8x64xf32>
    %53 = tpu.matmul %52, %50, %cst_31 {dimension_numbers = #tpu.dot_dimension_numbers<[1], [0], [0], [1], [0, 0, 1, 1], [], []>} : vector<8x32xbf16>, vector<32x64xbf16>, vector<8x64xf32> -> vector<8x64xf32>
    %54 = vector.extract_strided_slice %48 {offsets = [0, 64], sizes = [32, 64], strides = [1, 1]} : vector<32x256xf32> to vector<32x64xf32>
    %55 = arith.truncf %54 : vector<32x64xf32> to vector<32x64xbf16>
    %c1_32 = arith.constant 1 : index
    %c0_33 = arith.constant 0 : index
    %c0_34 = arith.constant 0 : index
    %56 = vector.load %arg7[%c1_32, %c0_33, %c0_34] : memref<4x8x32xbf16, #tpu.memory_space<vmem>>, vector<1x8x32xbf16>
    %57 = vector.shape_cast %56 : vector<1x8x32xbf16> to vector<8x32xbf16>
    %cst_35 = arith.constant dense<0.000000e+00> : vector<8x64xf32>
    %58 = tpu.matmul %57, %55, %cst_35 {dimension_numbers = #tpu.dot_dimension_numbers<[1], [0], [0], [1], [0, 0, 1, 1], [], []>} : vector<8x32xbf16>, vector<32x64xbf16>, vector<8x64xf32> -> vector<8x64xf32>
    %59 = arith.addf %53, %58 : vector<8x64xf32>
    %60 = vector.extract_strided_slice %48 {offsets = [0, 128], sizes = [32, 64], strides = [1, 1]} : vector<32x256xf32> to vector<32x64xf32>
    %61 = arith.truncf %60 : vector<32x64xf32> to vector<32x64xbf16>
    %c2_36 = arith.constant 2 : index
    %c0_37 = arith.constant 0 : index
    %c0_38 = arith.constant 0 : index
    %62 = vector.load %arg7[%c2_36, %c0_37, %c0_38] : memref<4x8x32xbf16, #tpu.memory_space<vmem>>, vector<1x8x32xbf16>
    %63 = vector.shape_cast %62 : vector<1x8x32xbf16> to vector<8x32xbf16>
    %cst_39 = arith.constant dense<0.000000e+00> : vector<8x64xf32>
    %64 = tpu.matmul %63, %61, %cst_39 {dimension_numbers = #tpu.dot_dimension_numbers<[1], [0], [0], [1], [0, 0, 1, 1], [], []>} : vector<8x32xbf16>, vector<32x64xbf16>, vector<8x64xf32> -> vector<8x64xf32>
    %65 = arith.addf %59, %64 : vector<8x64xf32>
    %66 = vector.extract_strided_slice %48 {offsets = [0, 192], sizes = [32, 64], strides = [1, 1]} : vector<32x256xf32> to vector<32x64xf32>
    %67 = arith.truncf %66 : vector<32x64xf32> to vector<32x64xbf16>
    %c3_40 = arith.constant 3 : index
    %c0_41 = arith.constant 0 : index
    %c0_42 = arith.constant 0 : index
    %68 = vector.load %arg7[%c3_40, %c0_41, %c0_42] : memref<4x8x32xbf16, #tpu.memory_space<vmem>>, vector<1x8x32xbf16>
    %69 = vector.shape_cast %68 : vector<1x8x32xbf16> to vector<8x32xbf16>
    %cst_43 = arith.constant dense<0.000000e+00> : vector<8x64xf32>
    %70 = tpu.matmul %69, %67, %cst_43 {dimension_numbers = #tpu.dot_dimension_numbers<[1], [0], [0], [1], [0, 0, 1, 1], [], []>} : vector<8x32xbf16>, vector<32x64xbf16>, vector<8x64xf32> -> vector<8x64xf32>
    %71 = arith.addf %65, %70 : vector<8x64xf32>
    %c0_44 = arith.constant 0 : index
    %c0_45 = arith.constant 0 : index
    %72 = vector.load %arg9[%c0_44, %c0_45] : memref<1x64xf32, #tpu.memory_space<vmem>>, vector<1x64xf32>
    %73 = vector.broadcast %72 : vector<1x64xf32> to vector<8x64xf32>
    %74 = arith.addf %71, %73 : vector<8x64xf32>
    %cst_46 = arith.constant 0.000000e+00 : f32
    %75 = vector.broadcast %cst_46 : f32 to vector<8x64xf32>
    %76 = arith.maximumf %74, %75 : vector<8x64xf32>
    %77 = arith.truncf %76 : vector<8x64xf32> to vector<8x64xbf16>
    %c0_47 = arith.constant 0 : index
    %c0_48 = arith.constant 0 : index
    %78 = vector.load %arg10[%c0_47, %c0_48] : memref<64x128xbf16, #tpu.memory_space<vmem>>, vector<64x128xbf16>
    %cst_49 = arith.constant dense<0.000000e+00> : vector<8x128xf32>
    %79 = tpu.matmul %77, %78, %cst_49 {dimension_numbers = #tpu.dot_dimension_numbers<[1], [0], [0], [1], [0, 0, 1, 1], [], []>} : vector<8x64xbf16>, vector<64x128xbf16>, vector<8x128xf32> -> vector<8x128xf32>
    %c0_50 = arith.constant 0 : index
    %c0_51 = arith.constant 0 : index
    %80 = vector.load %arg11[%c0_50, %c0_51] : memref<1x128xf32, #tpu.memory_space<vmem>>, vector<1x128xf32>
    %81 = vector.broadcast %80 : vector<1x128xf32> to vector<8x128xf32>
    %82 = arith.addf %79, %81 : vector<8x128xf32>
    %c0_52 = arith.constant 0 : index
    %c0_53 = arith.constant 0 : index
    %83 = vector.load %arg12[%c0_52, %c0_53] : memref<8x128xf32, #tpu.memory_space<vmem>>, vector<8x128xf32>
    tpu.vector_store %arg12[%c0_52, %c0_53], %82 {strides = array<i32>} : memref<8x128xf32, #tpu.memory_space<vmem>>, vector<8x128xf32>,
    return
  }
  func.func @transform_0(%arg0: i32) -> (i32, i32) {
    %c0_i32 = arith.constant 0 : i32
    %c0_i32_0 = arith.constant 0 : i32
    return %arg0, %c0_i32 : i32, i32
  }
  func.func @transform_1(%arg0: i32) -> (i32, i32) {
    %c0_i32 = arith.constant 0 : i32
    %c0_i32_0 = arith.constant 0 : i32
    %c0_i32_1 = arith.constant 0 : i32
    return %c0_i32, %c0_i32_0 : i32, i32
  }
  func.func @transform_2(%arg0: i32) -> (i32, i32) {
    %c0_i32 = arith.constant 0 : i32
    %c0_i32_0 = arith.constant 0 : i32
    %c0_i32_1 = arith.constant 0 : i32
    return %c0_i32, %c0_i32_0 : i32, i32
  }
  func.func @transform_3(%arg0: i32) -> (i32, i32, i32) {
    %c0_i32 = arith.constant 0 : i32
    %c0_i32_0 = arith.constant 0 : i32
    %c0_i32_1 = arith.constant 0 : i32
    %c0_i32_2 = arith.constant 0 : i32
    return %c0_i32, %c0_i32_0, %c0_i32_1 : i32, i32, i32
  }
  func.func @transform_4(%arg0: i32) -> (i32, i32) {
    %c0_i32 = arith.constant 0 : i32
    %c0_i32_0 = arith.constant 0 : i32
    %c0_i32_1 = arith.constant 0 : i32
    return %c0_i32, %c0_i32_0 : i32, i32
  }
  func.func @transform_5(%arg0: i32) -> (i32, i32) {
    %c0_i32 = arith.constant 0 : i32
    %c0_i32_0 = arith.constant 0 : i32
    %c0_i32_1 = arith.constant 0 : i32
    return %c0_i32, %c0_i32_0 : i32, i32
  }
  func.func @transform_6(%arg0: i32) -> (i32, i32, i32) {
    %c0_i32 = arith.constant 0 : i32
    %c0_i32_0 = arith.constant 0 : i32
    %c0_i32_1 = arith.constant 0 : i32
    %c0_i32_2 = arith.constant 0 : i32
    return %c0_i32, %c0_i32_0, %c0_i32_1 : i32, i32, i32
  }
  func.func @transform_7(%arg0: i32) -> (i32, i32) {
    %c0_i32 = arith.constant 0 : i32
    %c0_i32_0 = arith.constant 0 : i32
    %c0_i32_1 = arith.constant 0 : i32
    return %c0_i32, %c0_i32_0 : i32, i32
  }
  func.func @transform_8(%arg0: i32) -> (i32, i32) {
    %c0_i32 = arith.constant 0 : i32
    %c0_i32_0 = arith.constant 0 : i32
    %c0_i32_1 = arith.constant 0 : i32
    return %c0_i32, %c0_i32_0 : i32, i32
  }
  func.func @transform_9(%arg0: i32) -> (i32, i32) {
    %c0_i32 = arith.constant 0 : i32
    %c0_i32_0 = arith.constant 0 : i32
    %c0_i32_1 = arith.constant 0 : i32
    return %c0_i32, %c0_i32_0 : i32, i32
  }
  func.func @transform_10(%arg0: i32) -> (i32, i32) {
    %c0_i32 = arith.constant 0 : i32
    %c0_i32_0 = arith.constant 0 : i32
    %c0_i32_1 = arith.constant 0 : i32
    return %c0_i32, %c0_i32_0 : i32, i32
  }
  func.func @transform_11(%arg0: i32) -> (i32, i32) {
    %c0_i32 = arith.constant 0 : i32
    %c0_i32_0 = arith.constant 0 : i32
    return %arg0, %c0_i32 : i32, i32
  }
}

</mosaic_0001>

<llo_original>
// kernel: forward.1
$region0: #{forward.1}
  #allocation0 [shape = 'u32[]', space=smem, size = 0x4, offset = 0x4, fixed_abs, tag = 'smem constant byte address 0x4 - core index']
  #allocation1 [shape = 'u32[144,128]{1,0:T(1,128)}', space=vmem, size = 0x12000, scoped, tag = 'internal scratch']
  %s0 = inlined_call_operand.vmem [shape: bf16[288,12], index: 0, kind: input, shape index: {}]
  %s1 = inlined_call_operand.vmem [shape: bf16[12,16], index: 1, kind: input, shape index: {}]
  %s2 = inlined_call_operand.vmem [shape: f32[1,16], index: 2, kind: input, shape index: {}]
  %s3 = inlined_call_operand.vmem [shape: bf16[4,32,72], index: 3, kind: input, shape index: {}]
  %s4 = inlined_call_operand.vmem [shape: bf16[16,128], index: 4, kind: input, shape index: {}]
  %s5 = inlined_call_operand.vmem [shape: f32[1,32], index: 5, kind: input, shape index: {}]
  %s6 = inlined_call_operand.vmem [shape: bf16[4,8,32], index: 6, kind: input, shape index: {}]
  %s7 = inlined_call_operand.vmem [shape: bf16[32,256], index: 7, kind: input, shape index: {}]
  %s8 = inlined_call_operand.vmem [shape: f32[1,64], index: 8, kind: input, shape index: {}]
  %s9 = inlined_call_operand.vmem [shape: bf16[64,128], index: 9, kind: input, shape index: {}]
  %s10 = inlined_call_operand.vmem [shape: f32[1,128], index: 10, kind: input, shape index: {}]
  %s11 = inlined_call_operand.vmem [shape: f32[8,128], index: 11, kind: output, shape index: {}]
  %s12 = sld [smem:[#allocation0]]
  $region54: #{forward.1} parent=0
    _
  %s14 = ssub.s32 1, %s12
  %s15 = scalar_select 0, %s14, %s12
  // Predicated region
  $region2: #{forward.1} parent=0 // pred_check
    _
  $region3: #{forward.1} parent=0 // pred_check_branch
    %17 = sbr.rel (0) target = $region5
  $region4: #{forward.1} parent=0 // pred_region
    _
  $region5: #{forward.1} parent=0 // pred_fallthru
    _
  // Predicated region
  $region6: #{forward.1} parent=0 // pred_check
    _
  $region7: #{forward.1} parent=0 // pred_check_branch
    %19 = sbr.rel (0) target = $region9
  $region8: #{forward.1} parent=0 // pred_region
    _
  $region9: #{forward.1} parent=0 // pred_fallthru
    _
  // Predicated region
  $region10: #{forward.1} parent=0 // pred_check
    _
  $region11: #{forward.1} parent=0 // pred_check_branch
    %21 = sbr.rel (0) target = $region13
  $region12: #{forward.1} parent=0 // pred_region
    _
  $region13: #{forward.1} parent=0 // pred_fallthru
    _
  // Predicated region
  $region14: #{forward.1} parent=0 // pred_check
    _
  $region15: #{forward.1} parent=0 // pred_check_branch
    %23 = sbr.rel (0) target = $region17
  $region16: #{forward.1} parent=0 // pred_region
    _
  $region17: #{forward.1} parent=0 // pred_fallthru
    _
  // Predicated region
  $region18: #{forward.1} parent=0 // pred_check
    _
  $region19: #{forward.1} parent=0 // pred_check_branch
    %25 = sbr.rel (0) target = $region21
  $region20: #{forward.1} parent=0 // pred_region
    _
  $region21: #{forward.1} parent=0 // pred_fallthru
    _
  // Predicated region
  $region22: #{forward.1} parent=0 // pred_check
    _
  $region23: #{forward.1} parent=0 // pred_check_branch
    %27 = sbr.rel (0) target = $region25
  $region24: #{forward.1} parent=0 // pred_region
    _
  $region25: #{forward.1} parent=0 // pred_fallthru
    _
  // Predicated region
  $region26: #{forward.1} parent=0 // pred_check
    _
  $region27: #{forward.1} parent=0 // pred_check_branch
    %29 = sbr.rel (0) target = $region29
  $region28: #{forward.1} parent=0 // pred_region
    _
  $region29: #{forward.1} parent=0 // pred_fallthru
    _
  // Predicated region
  $region30: #{forward.1} parent=0 // pred_check
    _
  $region31: #{forward.1} parent=0 // pred_check_branch
    %31 = sbr.rel (0) target = $region33
  $region32: #{forward.1} parent=0 // pred_region
    _
  $region33: #{forward.1} parent=0 // pred_fallthru
    _
  // Predicated region
  $region34: #{forward.1} parent=0 // pred_check
    _
  $region35: #{forward.1} parent=0 // pred_check_branch
    %33 = sbr.rel (0) target = $region37
  $region36: #{forward.1} parent=0 // pred_region
    _
  $region37: #{forward.1} parent=0 // pred_fallthru
    _
  // Predicated region
  $region38: #{forward.1} parent=0 // pred_check
    _
  $region39: #{forward.1} parent=0 // pred_check_branch
    %35 = sbr.rel (0) target = $region41
  $region40: #{forward.1} parent=0 // pred_region
    _
  $region41: #{forward.1} parent=0 // pred_fallthru
    _
  // Predicated region
  $region42: #{forward.1} parent=0 // pred_check
    _
  $region43: #{forward.1} parent=0 // pred_check_branch
    %37 = sbr.rel (0) target = $region45
  $region44: #{forward.1} parent=0 // pred_region
    _
  $region45: #{forward.1} parent=0 // pred_fallthru
    _
  %v39 = vld [vmem:[%s0] sm:$0xf]
  %v40 = vld [vmem:[%s0 + $0x4] sm:$0xf]
  %v41 = vld [vmem:[%s0 + $0x8] sm:$0xf]
  %v42 = vld [vmem:[%s0 + $0xc] sm:$0xf]
  %v43 = vld [vmem:[%s0 + $0x10] sm:$0xf]
  %v44 = vld [vmem:[%s0 + $0x14] sm:$0xf]
  %v45 = vld [vmem:[%s0 + $0x18] sm:$0xf]
  %v46 = vld [vmem:[%s0 + $0x1c] sm:$0xf]
  %v47 = vld [vmem:[%s0 + $0x20] sm:$0xf]
  %v48 = vld [vmem:[%s0 + $0x24] sm:$0xf]
  %v49 = vld [vmem:[%s0 + $0x28] sm:$0xf]
  %v50 = vld [vmem:[%s0 + $0x2c] sm:$0xf]
  %v51 = vld [vmem:[%s0 + $0x30] sm:$0xf]
  %v52 = vld [vmem:[%s0 + $0x34] sm:$0xf]
  %v53 = vld [vmem:[%s0 + $0x38] sm:$0xf]
  %v54 = vld [vmem:[%s0 + $0x3c] sm:$0xf]
  %v55 = vld [vmem:[%s0 + $0x40] sm:$0xf]
  %v56 = vld [vmem:[%s0 + $0x44] sm:$0xf]
  %v57 = vld [vmem:[%s0 + $0x48] sm:$0xf]
  %v58 = vld [vmem:[%s0 + $0x4c] sm:$0xf]
  %v59 = vld [vmem:[%s0 + $0x50] sm:$0xf]
  %v60 = vld [vmem:[%s0 + $0x54] sm:$0xf]
  %v61 = vld [vmem:[%s0 + $0x58] sm:$0xf]
  %v62 = vld [vmem:[%s0 + $0x5c] sm:$0xf]
  %v63 = vld [vmem:[%s0 + $0x60] sm:$0xf]
  %v64 = vld [vmem:[%s0 + $0x64] sm:$0xf]
  %v65 = vld [vmem:[%s0 + $0x68] sm:$0xf]
  %v66 = vld [vmem:[%s0 + $0x6c] sm:$0xf]
  %v67 = vld [vmem:[%s0 + $0x70] sm:$0xf]
  %v68 = vld [vmem:[%s0 + $0x74] sm:$0xf]
  %v69 = vld [vmem:[%s0 + $0x78] sm:$0xf]
  %v70 = vld [vmem:[%s0 + $0x7c] sm:$0xf]
  %v71 = vld [vmem:[%s0 + $0x80] sm:$0xf]
  %v72 = vld [vmem:[%s0 + $0x84] sm:$0xf]
  %v73 = vld [vmem:[%s0 + $0x88] sm:$0xf]
  %v74 = vld [vmem:[%s0 + $0x8c] sm:$0xf]
  %v75 = vld [vmem:[%s1] sm:$0xf]
  %v76 = vld [vmem:[%s1 + $0x4] sm:$0x3]
  %v77 = vld [vmem:[%s2] sm:$0x1]
  %v79 = vlaneseq
  %v80 = vshrl.u32 %v79, 7
  %v81 = vsub.s32 0, %v80
  %v82 = vrot.slane %v77, %v81
  %v120 = vunpack.c.l.b16 %v39
  %v121 = vunpack.c.l.b16 %v40
  %v122 = vunpack.c.l.b16 %v41
  %v123 = vunpack.c.l.b16 %v42
  %v124 = vunpack.c.l.b16 %v43
  %v125 = vunpack.c.l.b16 %v44
  %v126 = vunpack.c.l.b16 %v45
  %v127 = vunpack.c.l.b16 %v46
  %v128 = vunpack.c.l.b16 %v47
  %v129 = vunpack.c.l.b16 %v48
  %v130 = vunpack.c.l.b16 %v49
  %v131 = vunpack.c.l.b16 %v50
  %v132 = vunpack.c.l.b16 %v51
  %v133 = vunpack.c.l.b16 %v52
  %v134 = vunpack.c.l.b16 %v53
  %v135 = vunpack.c.l.b16 %v54
  %v136 = vunpack.c.l.b16 %v55
  %v137 = vunpack.c.l.b16 %v56
  %v138 = vunpack.c.l.b16 %v57
  %v139 = vunpack.c.l.b16 %v58
  %v140 = vunpack.c.l.b16 %v59
  %v141 = vunpack.c.l.b16 %v60
  %v142 = vunpack.c.l.b16 %v61
  %v143 = vunpack.c.l.b16 %v62
  %v144 = vunpack.c.l.b16 %v63
  %v145 = vunpack.c.l.b16 %v64
  %v146 = vunpack.c.l.b16 %v65
  %v147 = vunpack.c.l.b16 %v66
  %v148 = vunpack.c.l.b16 %v67
  %v149 = vunpack.c.l.b16 %v68
  %v150 = vunpack.c.l.b16 %v69
  %v151 = vunpack.c.l.b16 %v70
  %v152 = vunpack.c.l.b16 %v71
  %v153 = vunpack.c.l.b16 %v72
  %v154 = vunpack.c.l.b16 %v73
  %v155 = vunpack.c.l.b16 %v74
  %v156 = vpack.c.b16 %v121, %v120
  %v157 = vpack.c.b16 %v123, %v122
  %v158 = vpack.c.b16 %v125, %v124
  %v159 = vpack.c.b16 %v127, %v126
  %v160 = vpack.c.b16 %v129, %v128
  %v161 = vpack.c.b16 %v131, %v130
  %v162 = vpack.c.b16 %v133, %v132
  %v163 = vpack.c.b16 %v135, %v134
  %v164 = vpack.c.b16 %v137, %v136
  %v165 = vpack.c.b16 %v139, %v138
  %v166 = vpack.c.b16 %v141, %v140
  %v167 = vpack.c.b16 %v143, %v142
  %v168 = vpack.c.b16 %v145, %v144
  %v169 = vpack.c.b16 %v147, %v146
  %v170 = vpack.c.b16 %v149, %v148
  %v171 = vpack.c.b16 %v151, %v150
  %v172 = vpack.c.b16 %v153, %v152
  %v173 = vpack.c.b16 %v155, %v154
  %v176 = vunpack.c.l.b16 %v75
  %v177 = vunpack.c.l.b16 %v76
  %v178 = vpack.c.b16 %v177, %v176
  %vm179 = vcmask 97280
  %v181 = vsel %vm179, %v156, 0
  %v184 = vsel %vm179, %v157, 0
  %v187 = vsel %vm179, %v158, 0
  %v190 = vsel %vm179, %v159, 0
  %v193 = vsel %vm179, %v160, 0
  %v196 = vsel %vm179, %v161, 0
  %v199 = vsel %vm179, %v162, 0
  %v202 = vsel %vm179, %v163, 0
  %v205 = vsel %vm179, %v164, 0
  %v208 = vsel %vm179, %v165, 0
  %v211 = vsel %vm179, %v166, 0
  %v214 = vsel %vm179, %v167, 0
  %v217 = vsel %vm179, %v168, 0
  %v220 = vsel %vm179, %v169, 0
  %v223 = vsel %vm179, %v170, 0
  %v226 = vsel %vm179, %v171, 0
  %v229 = vsel %vm179, %v172, 0
  %v232 = vsel %vm179, %v173, 0
  %vm234 = vcmask 1045504
  %v236 = vsel %vm234, %v178, 0
  %238 = vmatprep.subr.bf16.mxu0 0
  %239 = vmatpush1.bf16.msra.mxu0 0
  %240 = vmatprep.subr.bf16.mxu0 0
  %241 = vmatpush1.bf16.msra.mxu0 0
  %242 = vmatprep.subr.bf16.mxu0 0
  %243 = vmatpush1.bf16.msra.mxu0 0
  %244 = vmatprep.subr.bf16.mxu0 0
  %245 = vmatpush1.bf16.msra.mxu0 0
  %246 = vmatprep.subr.bf16.mxu0 0
  %247 = vmatpush1.bf16.msra.mxu0 0
  %248 = vmatprep.subr.bf16.mxu0 0
  %249 = vmatpush1.bf16.msra.mxu0 0
  %250 = vmatprep.subr.bf16.mxu0 0
  %251 = vmatpush1.bf16.msra.mxu0 0
  %252 = vmatprep.subr.bf16.mxu0 0
  %253 = vmatpush1.bf16.msra.mxu0 %v236
  %254 = vmatprep.subr.bf16.mxu0 0
  %255 = vmatpush2.bf16.msra.mxu0 0
  %256 = vmatprep.subr.bf16.mxu0 0
  %257 = vmatpush2.bf16.msra.mxu0 0
  %258 = vmatprep.subr.bf16.mxu0 0
  %259 = vmatpush2.bf16.msra.mxu0 0
  %260 = vmatprep.subr.bf16.mxu0 0
  %261 = vmatpush2.bf16.msra.mxu0 0
  %262 = vmatprep.subr.bf16.mxu0 0
  %263 = vmatpush2.bf16.msra.mxu0 0
  %264 = vmatprep.subr.bf16.mxu0 0
  %265 = vmatpush2.bf16.msra.mxu0 0
  %266 = vmatprep.subr.bf16.mxu0 0
  %267 = vmatpush2.bf16.msra.mxu0 0
  %268 = vmatprep.subr.bf16.mxu0 0
  %269 = vmatpush2.bf16.msra.mxu0 0
  %270 = vmatprep.mubr.bf16.mxu0 0
  %271 = vmatmul.mubr.bf16.gmra.mxu0 %v181
  %v272 = vpop.f32.mrf.mxu0
  %v273 = vadd.f32 %v82, %v272
  %v274 = vpop.f32.mrf.mxu0
  %v275 = vpop.f32.mrf.mxu0
  %v276 = vadd.f32 %v82, %v275
  %v277 = vpop.f32.mrf.mxu0
  %278 = vmatprep.mubr.bf16.mxu0 0
  %279 = vmatmul.mubr.bf16.gmra.mxu0 %v184
  %v280 = vpop.f32.mrf.mxu0
  %v281 = vadd.f32 %v82, %v280
  %v282 = vpop.f32.mrf.mxu0
  %v283 = vpop.f32.mrf.mxu0
  %v284 = vadd.f32 %v82, %v283
  %v285 = vpop.f32.mrf.mxu0
  %286 = vmatprep.mubr.bf16.mxu0 0
  %287 = vmatmul.mubr.bf16.gmra.mxu0 %v187
  %v288 = vpop.f32.mrf.mxu0
  %v289 = vadd.f32 %v82, %v288
  %v290 = vpop.f32.mrf.mxu0
  %v291 = vpop.f32.mrf.mxu0
  %v292 = vadd.f32 %v82, %v291
  %v293 = vpop.f32.mrf.mxu0
  %294 = vmatprep.mubr.bf16.mxu0 0
  %295 = vmatmul.mubr.bf16.gmra.mxu0 %v190
  %v296 = vpop.f32.mrf.mxu0
  %v297 = vadd.f32 %v82, %v296
  %v298 = vpop.f32.mrf.mxu0
  %v299 = vpop.f32.mrf.mxu0
  %v300 = vadd.f32 %v82, %v299
  %v301 = vpop.f32.mrf.mxu0
  %302 = vmatprep.mubr.bf16.mxu0 0
  %303 = vmatmul.mubr.bf16.gmra.mxu0 %v193
  %v304 = vpop.f32.mrf.mxu0
  %v305 = vadd.f32 %v82, %v304
  %v306 = vpop.f32.mrf.mxu0
  %v307 = vpop.f32.mrf.mxu0
  %v308 = vadd.f32 %v82, %v307
  %v309 = vpop.f32.mrf.mxu0
  %310 = vmatprep.mubr.bf16.mxu0 0
  %311 = vmatmul.mubr.bf16.gmra.mxu0 %v196
  %v312 = vpop.f32.mrf.mxu0
  %v313 = vadd.f32 %v82, %v312
  %v314 = vpop.f32.mrf.mxu0
  %v315 = vpop.f32.mrf.mxu0
  %v316 = vadd.f32 %v82, %v315
  %v317 = vpop.f32.mrf.mxu0
  %318 = vmatprep.mubr.bf16.mxu0 0
  %319 = vmatmul.mubr.bf16.gmra.mxu0 %v199
  %v320 = vpop.f32.mrf.mxu0
  %v321 = vadd.f32 %v82, %v320
  %v322 = vpop.f32.mrf.mxu0
  %v323 = vpop.f32.mrf.mxu0
  %v324 = vadd.f32 %v82, %v323
  %v325 = vpop.f32.mrf.mxu0
  %326 = vmatprep.mubr.bf16.mxu0 0
  %327 = vmatmul.mubr.bf16.gmra.mxu0 %v202
  %v328 = vpop.f32.mrf.mxu0
  %v329 = vadd.f32 %v82, %v328
  %v330 = vpop.f32.mrf.mxu0
  %v331 = vpop.f32.mrf.mxu0
  %v332 = vadd.f32 %v82, %v331
  %v333 = vpop.f32.mrf.mxu0
  %334 = vmatprep.mubr.bf16.mxu0 0
  %335 = vmatmul.mubr.bf16.gmra.mxu0 %v205
  %v336 = vpop.f32.mrf.mxu0
  %v337 = vadd.f32 %v82, %v336
  %v338 = vpop.f32.mrf.mxu0
  %v339 = vpop.f32.mrf.mxu0
  %v340 = vadd.f32 %v82, %v339
  %v341 = vpop.f32.mrf.mxu0
  %342 = vmatprep.mubr.bf16.mxu0 0
  %343 = vmatmul.mubr.bf16.gmra.mxu0 %v208
  %v344 = vpop.f32.mrf.mxu0
  %v345 = vadd.f32 %v82, %v344
  %v346 = vpop.f32.mrf.mxu0
  %v347 = vpop.f32.mrf.mxu0
  %v348 = vadd.f32 %v82, %v347
  %v349 = vpop.f32.mrf.mxu0
  %350 = vmatprep.mubr.bf16.mxu0 0
  %351 = vmatmul.mubr.bf16.gmra.mxu0 %v211
  %v352 = vpop.f32.mrf.mxu0
  %v353 = vadd.f32 %v82, %v352
  %v354 = vpop.f32.mrf.mxu0
  %v355 = vpop.f32.mrf.mxu0
  %v356 = vadd.f32 %v82, %v355
  %v357 = vpop.f32.mrf.mxu0
  %358 = vmatprep.mubr.bf16.mxu0 0
  %359 = vmatmul.mubr.bf16.gmra.mxu0 %v214
  %v360 = vpop.f32.mrf.mxu0
  %v361 = vadd.f32 %v82, %v360
  %v362 = vpop.f32.mrf.mxu0
  %v363 = vpop.f32.mrf.mxu0
  %v364 = vadd.f32 %v82, %v363
  %v365 = vpop.f32.mrf.mxu0
  %366 = vmatprep.mubr.bf16.mxu0 0
  %367 = vmatmul.mubr.bf16.gmra.mxu0 %v217
  %v368 = vpop.f32.mrf.mxu0
  %v369 = vadd.f32 %v82, %v368
  %v370 = vpop.f32.mrf.mxu0
  %v371 = vpop.f32.mrf.mxu0
  %v372 = vadd.f32 %v82, %v371
  %v373 = vpop.f32.mrf.mxu0
  %374 = vmatprep.mubr.bf16.mxu0 0
  %375 = vmatmul.mubr.bf16.gmra.mxu0 %v220
  %v376 = vpop.f32.mrf.mxu0
  %v377 = vadd.f32 %v82, %v376
  %v378 = vpop.f32.mrf.mxu0
  %v379 = vpop.f32.mrf.mxu0
  %v380 = vadd.f32 %v82, %v379
  %v381 = vpop.f32.mrf.mxu0
  %382 = vmatprep.mubr.bf16.mxu0 0
  %383 = vmatmul.mubr.bf16.gmra.mxu0 %v223
  %v384 = vpop.f32.mrf.mxu0
  %v385 = vadd.f32 %v82, %v384
  %v386 = vpop.f32.mrf.mxu0
  %v387 = vpop.f32.mrf.mxu0
  %v388 = vadd.f32 %v82, %v387
  %v389 = vpop.f32.mrf.mxu0
  %390 = vmatprep.mubr.bf16.mxu0 0
  %391 = vmatmul.mubr.bf16.gmra.mxu0 %v226
  %v392 = vpop.f32.mrf.mxu0
  %v393 = vadd.f32 %v82, %v392
  %v394 = vpop.f32.mrf.mxu0
  %v395 = vpop.f32.mrf.mxu0
  %v396 = vadd.f32 %v82, %v395
  %v397 = vpop.f32.mrf.mxu0
  %398 = vmatprep.mubr.bf16.mxu0 0
  %399 = vmatmul.mubr.bf16.gmra.mxu0 %v229
  %v400 = vpop.f32.mrf.mxu0
  %v401 = vadd.f32 %v82, %v400
  %v402 = vpop.f32.mrf.mxu0
  %v403 = vpop.f32.mrf.mxu0
  %v404 = vadd.f32 %v82, %v403
  %v405 = vpop.f32.mrf.mxu0
  %406 = vmatprep.mubr.bf16.mxu0 0
  %407 = vmatmul.mubr.bf16.gmra.mxu0 %v232
  %v408 = vpop.f32.mrf.mxu0
  %v409 = vadd.f32 %v82, %v408
  %v410 = vpop.f32.mrf.mxu0
  %v411 = vpop.f32.mrf.mxu0
  %v412 = vadd.f32 %v82, %v411
  %v413 = vpop.f32.mrf.mxu0
  %414 = vdwg.mxu0
  %v415 = vmax.f32 %v273, 0.0
  %v416 = vmax.f32 %v276, 0.0
  %v417 = vmax.f32 %v281, 0.0
  %v418 = vmax.f32 %v284, 0.0
  %v419 = vmax.f32 %v289, 0.0
  %v420 = vmax.f32 %v292, 0.0
  %v421 = vmax.f32 %v297, 0.0
  %v422 = vmax.f32 %v300, 0.0
  %v423 = vmax.f32 %v305, 0.0
  %v424 = vmax.f32 %v308, 0.0
  %v425 = vmax.f32 %v313, 0.0
  %v426 = vmax.f32 %v316, 0.0
  %v427 = vmax.f32 %v321, 0.0
  %v428 = vmax.f32 %v324, 0.0
  %v429 = vmax.f32 %v329, 0.0
  %v430 = vmax.f32 %v332, 0.0
  %v431 = vmax.f32 %v337, 0.0
  %v432 = vmax.f32 %v340, 0.0
  %v433 = vmax.f32 %v345, 0.0
  %v434 = vmax.f32 %v348, 0.0
  %v435 = vmax.f32 %v353, 0.0
  %v436 = vmax.f32 %v356, 0.0
  %v437 = vmax.f32 %v361, 0.0
  %v438 = vmax.f32 %v364, 0.0
  %v439 = vmax.f32 %v369, 0.0
  %v440 = vmax.f32 %v372, 0.0
  %v441 = vmax.f32 %v377, 0.0
  %v442 = vmax.f32 %v380, 0.0
  %v443 = vmax.f32 %v385, 0.0
  %v444 = vmax.f32 %v388, 0.0
  %v445 = vmax.f32 %v393, 0.0
  %v446 = vmax.f32 %v396, 0.0
  %v447 = vmax.f32 %v401, 0.0
  %v448 = vmax.f32 %v404, 0.0
  %v449 = vmax.f32 %v409, 0.0
  %v450 = vmax.f32 %v412, 0.0
  %v451 = vmax.f32 %v415, %v424
  %v452 = vmax.f32 %v416, %v425
  %v453 = vmax.f32 %v417, %v426
  %v454 = vmax.f32 %v418, %v427
  %v455 = vmax.f32 %v419, %v428
  %v456 = vmax.f32 %v420, %v429
  %v457 = vmax.f32 %v421, %v430
  %v458 = vmax.f32 %v422, %v431
  %v459 = vmax.f32 %v423, %v432
  %v460 = vmax.f32 %v433, %v442
  %v461 = vmax.f32 %v434, %v443
  %v462 = vmax.f32 %v435, %v444
  %v463 = vmax.f32 %v436, %v445
  %v464 = vmax.f32 %v437, %v446
  %v465 = vmax.f32 %v438, %v447
  %v466 = vmax.f32 %v439, %v448
  %v467 = vmax.f32 %v440, %v449
  %v468 = vmax.f32 %v441, %v450
  %v469 = vmax.f32 %v451, %v460
  %v470 = vmax.f32 %v452, %v461
  %v471 = vmax.f32 %v453, %v462
  %v472 = vmax.f32 %v454, %v463
  %v473 = vmax.f32 %v455, %v464
  %v474 = vmax.f32 %v456, %v465
  %v475 = vmax.f32 %v457, %v466
  %v476 = vmax.f32 %v458, %v467
  %v477 = vmax.f32 %v459, %v468
  %v478 = vpack.c.bf16 %v470, %v469
  %v479 = vpack.c.bf16 %v472, %v471
  %v480 = vpack.c.bf16 %v474, %v473
  %v481 = vpack.c.bf16 %v476, %v475
  %v482 = vpack.c.bf16 %v477, %v477
  %v483 = vld [vmem:[%s4] sm:$0xf]
  %v484 = vld [vmem:[%s4 + $0x4] sm:$0xf]
  %v487 = vunpack.c.l.b16 %v483
  %v488 = vunpack.c.l.b16 %v484
  %v489 = vpack.c.b16 %v488, %v487
  %vm491 = vcmask 130048
  %v493 = vsel %vm491, %v478, 0
  %v496 = vsel %vm491, %v479, 0
  %v499 = vsel %vm491, %v480, 0
  %v502 = vsel %vm491, %v481, 0
  %v505 = vsel %vm491, %v482, 0
  %507 = vmatprep.subr.bf16.mxu0 0
  %508 = vmatpush1.bf16.msra.mxu0 0
  %509 = vmatprep.subr.bf16.mxu0 0
  %510 = vmatpush1.bf16.msra.mxu0 0
  %511 = vmatprep.subr.bf16.mxu0 0
  %512 = vmatpush1.bf16.msra.mxu0 0
  %513 = vmatprep.subr.bf16.mxu0 0
  %514 = vmatpush1.bf16.msra.mxu0 0
  %515 = vmatprep.subr.bf16.mxu0 0
  %516 = vmatpush1.bf16.msra.mxu0 0
  %517 = vmatprep.subr.bf16.mxu0 0
  %518 = vmatpush1.bf16.msra.mxu0 0
  %519 = vmatprep.subr.bf16.mxu0 0
  %520 = vmatpush1.bf16.msra.mxu0 0
  %521 = vmatprep.subr.bf16.mxu0 0
  %522 = vmatpush1.bf16.msra.mxu0 %v489
  %523 = vmatprep.subr.bf16.mxu0 0
  %524 = vmatpush2.bf16.msra.mxu0 0
  %525 = vmatprep.subr.bf16.mxu0 0
  %526 = vmatpush2.bf16.msra.mxu0 0
  %527 = vmatprep.subr.bf16.mxu0 0
  %528 = vmatpush2.bf16.msra.mxu0 0
  %529 = vmatprep.subr.bf16.mxu0 0
  %530 = vmatpush2.bf16.msra.mxu0 0
  %531 = vmatprep.subr.bf16.mxu0 0
  %532 = vmatpush2.bf16.msra.mxu0 0
  %533 = vmatprep.subr.bf16.mxu0 0
  %534 = vmatpush2.bf16.msra.mxu0 0
  %535 = vmatprep.subr.bf16.mxu0 0
  %536 = vmatpush2.bf16.msra.mxu0 0
  %537 = vmatprep.subr.bf16.mxu0 0
  %538 = vmatpush2.bf16.msra.mxu0 0
  %539 = vmatprep.mubr.bf16.mxu0 0
  %540 = vmatmul.mubr.bf16.gmra.mxu0 %v493
  %v541 = vpop.f32.mrf.mxu0
  %v542 = vadd.f32 0.0, %v541
  %v543 = vpop.f32.mrf.mxu0
  %v544 = vpop.f32.mrf.mxu0
  %v545 = vadd.f32 0.0, %v544
  %v546 = vpop.f32.mrf.mxu0
  %547 = vmatprep.mubr.bf16.mxu0 0
  %548 = vmatmul.mubr.bf16.gmra.mxu0 %v496
  %v549 = vpop.f32.mrf.mxu0
  %v550 = vadd.f32 0.0, %v549
  %v551 = vpop.f32.mrf.mxu0
  %v552 = vpop.f32.mrf.mxu0
  %v553 = vadd.f32 0.0, %v552
  %v554 = vpop.f32.mrf.mxu0
  %555 = vmatprep.mubr.bf16.mxu0 0
  %556 = vmatmul.mubr.bf16.gmra.mxu0 %v499
  %v557 = vpop.f32.mrf.mxu0
  %v558 = vadd.f32 0.0, %v557
  %v559 = vpop.f32.mrf.mxu0
  %v560 = vpop.f32.mrf.mxu0
  %v561 = vadd.f32 0.0, %v560
  %v562 = vpop.f32.mrf.mxu0
  %563 = vmatprep.mubr.bf16.mxu0 0
  %564 = vmatmul.mubr.bf16.gmra.mxu0 %v502
  %v565 = vpop.f32.mrf.mxu0
  %v566 = vadd.f32 0.0, %v565
  %v567 = vpop.f32.mrf.mxu0
  %v568 = vpop.f32.mrf.mxu0
  %v569 = vadd.f32 0.0, %v568
  %v570 = vpop.f32.mrf.mxu0
  %571 = vmatprep.mubr.bf16.mxu0 0
  %572 = vmatmul.mubr.bf16.gmra.mxu0 %v505
  %v573 = vpop.f32.mrf.mxu0
  %v574 = vadd.f32 0.0, %v573
  %v575 = vpop.f32.mrf.mxu0
  %v576 = vpop.f32.mrf.mxu0
  %v577 = vpop.f32.mrf.mxu0
  %578 = vdwg.mxu0
  %v579 = vpack.c.bf16 %v545, %v542
  %v580 = vpack.c.bf16 %v553, %v550
  %v581 = vpack.c.bf16 %v561, %v558
  %v582 = vpack.c.bf16 %v569, %v566
  %v583 = vpack.c.bf16 %v574, %v574
  %v584 = vld [vmem:[%s3] sm:$0xf]
  %v585 = vld [vmem:[%s3 + $0x4] sm:$0xf]
  %v586 = vld [vmem:[%s3 + $0x8] sm:$0xf]
  %v587 = vld [vmem:[%s3 + $0xc] sm:$0xf]
  %s588 = scalar_lea.vmem %s3, 16
  %v589 = vld [vmem:[%s588] sm:$0xf]
  %v590 = vld [vmem:[%s588 + $0x4] sm:$0xf]
  %v591 = vld [vmem:[%s588 + $0x8] sm:$0xf]
  %v592 = vld [vmem:[%s588 + $0xc] sm:$0xf]
  %v597 = vunpack.c.l.b16 %v589
  %v598 = vunpack.c.l.b16 %v590
  %v599 = vunpack.c.l.b16 %v591
  %v600 = vunpack.c.l.b16 %v592
  %v601 = vpack.c.b16 %v598, %v597
  %v602 = vpack.c.b16 %v600, %v599
  %608 = vrot.lane.b32.xlu0 %v579, 96
  %v609 = vpop.permute.xlu0 %608
  %610 = vrot.lane.b32.xlu0 %v580, 96
  %v611 = vpop.permute.xlu0 %610
  %612 = vrot.lane.b32.xlu0 %v581, 96
  %v613 = vpop.permute.xlu0 %612
  %614 = vrot.lane.b32.xlu0 %v582, 96
  %v615 = vpop.permute.xlu0 %614
  %616 = vrot.lane.b32.xlu0 %v583, 96
  %v617 = vpop.permute.xlu0 %616
  %vm622 = vcmask 588800
  %v624 = vsel %vm622, %v601, 0
  %v627 = vsel %vm622, %v602, 0
  %vm629 = vcmask 1043456
  %v631 = vsel %vm629, %v617, 0
  %633 = vmatprep.subr.bf16.mxu0 0
  %634 = vmatpush1.bf16.msra.mxu0 0
  %635 = vmatprep.subr.bf16.mxu0 0
  %636 = vmatpush1.bf16.msra.mxu0 0
  %637 = vmatprep.subr.bf16.mxu0 0
  %638 = vmatpush1.bf16.msra.mxu0 0
  %639 = vmatprep.subr.bf16.mxu0 0
  %640 = vmatpush1.bf16.msra.mxu0 %v631
  %641 = vmatprep.subr.bf16.mxu0 0
  %642 = vmatpush1.bf16.msra.mxu0 %v615
  %643 = vmatprep.subr.bf16.mxu0 0
  %644 = vmatpush1.bf16.msra.mxu0 %v613
  %645 = vmatprep.subr.bf16.mxu0 0
  %646 = vmatpush1.bf16.msra.mxu0 %v611
  %647 = vmatprep.subr.bf16.mxu0 0
  %648 = vmatpush1.bf16.msra.mxu0 %v609
  %649 = vmatprep.subr.bf16.mxu0 0
  %650 = vmatpush2.bf16.msra.mxu0 0
  %651 = vmatprep.subr.bf16.mxu0 0
  %652 = vmatpush2.bf16.msra.mxu0 0
  %653 = vmatprep.subr.bf16.mxu0 0
  %654 = vmatpush2.bf16.msra.mxu0 0
  %655 = vmatprep.subr.bf16.mxu0 0
  %656 = vmatpush2.bf16.msra.mxu0 0
  %657 = vmatprep.subr.bf16.mxu0 0
  %658 = vmatpush2.bf16.msra.mxu0 0
  %659 = vmatprep.subr.bf16.mxu0 0
  %660 = vmatpush2.bf16.msra.mxu0 0
  %661 = vmatprep.subr.bf16.mxu0 0
  %662 = vmatpush2.bf16.msra.mxu0 0
  %663 = vmatprep.subr.bf16.mxu0 0
  %664 = vmatpush2.bf16.msra.mxu0 0
  %665 = vmatprep.mubr.bf16.mxu0 0
  %666 = vmatmul.mubr.bf16.gmra.mxu0 %v624
  %v667 = vpop.f32.mrf.mxu0
  %v668 = vadd.f32 0.0, %v667
  %v669 = vpop.f32.mrf.mxu0
  %v670 = vpop.f32.mrf.mxu0
  %v671 = vadd.f32 0.0, %v670
  %v672 = vpop.f32.mrf.mxu0
  %673 = vmatprep.mubr.bf16.mxu0 0
  %674 = vmatmul.mubr.bf16.gmra.mxu0 %v627
  %v675 = vpop.f32.mrf.mxu0
  %v676 = vadd.f32 0.0, %v675
  %v677 = vpop.f32.mrf.mxu0
  %v678 = vpop.f32.mrf.mxu0
  %v679 = vadd.f32 0.0, %v678
  %v680 = vpop.f32.mrf.mxu0
  %681 = vdwg.mxu0
  %v686 = vunpack.c.l.b16 %v584
  %v687 = vunpack.c.l.b16 %v585
  %v688 = vunpack.c.l.b16 %v586
  %v689 = vunpack.c.l.b16 %v587
  %v690 = vpack.c.b16 %v687, %v686
  %v691 = vpack.c.b16 %v689, %v688
  %v693 = vsel %vm622, %v690, 0
  %v696 = vsel %vm622, %v691, 0
  %v699 = vsel %vm629, %v583, 0
  %701 = vmatprep.subr.bf16.mxu0 0
  %702 = vmatpush1.bf16.msra.mxu0 0
  %703 = vmatprep.subr.bf16.mxu0 0
  %704 = vmatpush1.bf16.msra.mxu0 0
  %705 = vmatprep.subr.bf16.mxu0 0
  %706 = vmatpush1.bf16.msra.mxu0 0
  %707 = vmatprep.subr.bf16.mxu0 0
  %708 = vmatpush1.bf16.msra.mxu0 %v699
  %709 = vmatprep.subr.bf16.mxu0 0
  %710 = vmatpush1.bf16.msra.mxu0 %v582
  %711 = vmatprep.subr.bf16.mxu0 0
  %712 = vmatpush1.bf16.msra.mxu0 %v581
  %713 = vmatprep.subr.bf16.mxu0 0
  %714 = vmatpush1.bf16.msra.mxu0 %v580
  %715 = vmatprep.subr.bf16.mxu0 0
  %716 = vmatpush1.bf16.msra.mxu0 %v579
  %717 = vmatprep.subr.bf16.mxu0 0
  %718 = vmatpush2.bf16.msra.mxu0 0
  %719 = vmatprep.subr.bf16.mxu0 0
  %720 = vmatpush2.bf16.msra.mxu0 0
  %721 = vmatprep.subr.bf16.mxu0 0
  %722 = vmatpush2.bf16.msra.mxu0 0
  %723 = vmatprep.subr.bf16.mxu0 0
  %724 = vmatpush2.bf16.msra.mxu0 0
  %725 = vmatprep.subr.bf16.mxu0 0
  %726 = vmatpush2.bf16.msra.mxu0 0
  %727 = vmatprep.subr.bf16.mxu0 0
  %728 = vmatpush2.bf16.msra.mxu0 0
  %729 = vmatprep.subr.bf16.mxu0 0
  %730 = vmatpush2.bf16.msra.mxu0 0
  %731 = vmatprep.subr.bf16.mxu0 0
  %732 = vmatpush2.bf16.msra.mxu0 0
  %733 = vmatprep.mubr.bf16.mxu0 0
  %734 = vmatmul.mubr.bf16.gmra.mxu0 %v693
  %v735 = vpop.f32.mrf.mxu0
  %v736 = vadd.f32 %v668, %v735
  %v737 = vpop.f32.mrf.mxu0
  %v738 = vpop.f32.mrf.mxu0
  %v739 = vadd.f32 %v671, %v738
  %v740 = vpop.f32.mrf.mxu0
  %741 = vmatprep.mubr.bf16.mxu0 0
  %742 = vmatmul.mubr.bf16.gmra.mxu0 %v696
  %v743 = vpop.f32.mrf.mxu0
  %v744 = vadd.f32 %v676, %v743
  %v745 = vpop.f32.mrf.mxu0
  %v746 = vpop.f32.mrf.mxu0
  %v747 = vadd.f32 %v679, %v746
  %v748 = vpop.f32.mrf.mxu0
  %749 = vdwg.mxu0
  %s750 = scalar_lea.vmem %s3, 32
  %v751 = vld [vmem:[%s750] sm:$0xf]
  %v752 = vld [vmem:[%s750 + $0x4] sm:$0xf]
  %v753 = vld [vmem:[%s750 + $0x8] sm:$0xf]
  %v754 = vld [vmem:[%s750 + $0xc] sm:$0xf]
  %v759 = vunpack.c.l.b16 %v751
  %v760 = vunpack.c.l.b16 %v752
  %v761 = vunpack.c.l.b16 %v753
  %v762 = vunpack.c.l.b16 %v754
  %v763 = vpack.c.b16 %v760, %v759
  %v764 = vpack.c.b16 %v762, %v761
  %765 = vrot.lane.b32.xlu0 %v579, 64
  %v766 = vpop.permute.xlu0 %765
  %767 = vrot.lane.b32.xlu0 %v580, 64
  %v768 = vpop.permute.xlu0 %767
  %769 = vrot.lane.b32.xlu0 %v581, 64
  %v770 = vpop.permute.xlu0 %769
  %771 = vrot.lane.b32.xlu0 %v582, 64
  %v772 = vpop.permute.xlu0 %771
  %773 = vrot.lane.b32.xlu0 %v583, 64
  %v774 = vpop.permute.xlu0 %773
  %v780 = vsel %vm622, %v763, 0
  %v783 = vsel %vm622, %v764, 0
  %v786 = vsel %vm629, %v774, 0
  %788 = vmatprep.subr.bf16.mxu0 0
  %789 = vmatpush1.bf16.msra.mxu0 0
  %790 = vmatprep.subr.bf16.mxu0 0
  %791 = vmatpush1.bf16.msra.mxu0 0
  %792 = vmatprep.subr.bf16.mxu0 0
  %793 = vmatpush1.bf16.msra.mxu0 0
  %794 = vmatprep.subr.bf16.mxu0 0
  %795 = vmatpush1.bf16.msra.mxu0 %v786
  %796 = vmatprep.subr.bf16.mxu0 0
  %797 = vmatpush1.bf16.msra.mxu0 %v772
  %798 = vmatprep.subr.bf16.mxu0 0
  %799 = vmatpush1.bf16.msra.mxu0 %v770
  %800 = vmatprep.subr.bf16.mxu0 0
  %801 = vmatpush1.bf16.msra.mxu0 %v768
  %802 = vmatprep.subr.bf16.mxu0 0
  %803 = vmatpush1.bf16.msra.mxu0 %v766
  %804 = vmatprep.subr.bf16.mxu0 0
  %805 = vmatpush2.bf16.msra.mxu0 0
  %806 = vmatprep.subr.bf16.mxu0 0
  %807 = vmatpush2.bf16.msra.mxu0 0
  %808 = vmatprep.subr.bf16.mxu0 0
  %809 = vmatpush2.bf16.msra.mxu0 0
  %810 = vmatprep.subr.bf16.mxu0 0
  %811 = vmatpush2.bf16.msra.mxu0 0
  %812 = vmatprep.subr.bf16.mxu0 0
  %813 = vmatpush2.bf16.msra.mxu0 0
  %814 = vmatprep.subr.bf16.mxu0 0
  %815 = vmatpush2.bf16.msra.mxu0 0
  %816 = vmatprep.subr.bf16.mxu0 0
  %817 = vmatpush2.bf16.msra.mxu0 0
  %818 = vmatprep.subr.bf16.mxu0 0
  %819 = vmatpush2.bf16.msra.mxu0 0
  %820 = vmatprep.mubr.bf16.mxu0 0
  %821 = vmatmul.mubr.bf16.gmra.mxu0 %v780
  %v822 = vpop.f32.mrf.mxu0
  %v823 = vadd.f32 0.0, %v822
  %v824 = vpop.f32.mrf.mxu0
  %v825 = vpop.f32.mrf.mxu0
  %v826 = vadd.f32 0.0, %v825
  %v827 = vpop.f32.mrf.mxu0
  %828 = vmatprep.mubr.bf16.mxu0 0
  %829 = vmatmul.mubr.bf16.gmra.mxu0 %v783
  %v830 = vpop.f32.mrf.mxu0
  %v831 = vadd.f32 0.0, %v830
  %v832 = vpop.f32.mrf.mxu0
  %v833 = vpop.f32.mrf.mxu0
  %v834 = vadd.f32 0.0, %v833
  %v835 = vpop.f32.mrf.mxu0
  %836 = vdwg.mxu0
  %v837 = vadd.f32 %v736, %v823
  %v838 = vadd.f32 %v739, %v826
  %v839 = vadd.f32 %v744, %v831
  %v840 = vadd.f32 %v747, %v834
  %s841 = scalar_lea.vmem %s3, 48
  %v842 = vld [vmem:[%s841] sm:$0xf]
  %v843 = vld [vmem:[%s841 + $0x4] sm:$0xf]
  %v844 = vld [vmem:[%s841 + $0x8] sm:$0xf]
  %v845 = vld [vmem:[%s841 + $0xc] sm:$0xf]
  %v850 = vunpack.c.l.b16 %v842
  %v851 = vunpack.c.l.b16 %v843
  %v852 = vunpack.c.l.b16 %v844
  %v853 = vunpack.c.l.b16 %v845
  %v854 = vpack.c.b16 %v851, %v850
  %v855 = vpack.c.b16 %v853, %v852
  %856 = vrot.lane.b32.xlu0 %v579, 32
  %v857 = vpop.permute.xlu0 %856
  %858 = vrot.lane.b32.xlu0 %v580, 32
  %v859 = vpop.permute.xlu0 %858
  %860 = vrot.lane.b32.xlu0 %v581, 32
  %v861 = vpop.permute.xlu0 %860
  %862 = vrot.lane.b32.xlu0 %v582, 32
  %v863 = vpop.permute.xlu0 %862
  %864 = vrot.lane.b32.xlu0 %v583, 32
  %v865 = vpop.permute.xlu0 %864
  %v871 = vsel %vm622, %v854, 0
  %v874 = vsel %vm622, %v855, 0
  %v877 = vsel %vm629, %v865, 0
  %879 = vmatprep.subr.bf16.mxu0 0
  %880 = vmatpush1.bf16.msra.mxu0 0
  %881 = vmatprep.subr.bf16.mxu0 0
  %882 = vmatpush1.bf16.msra.mxu0 0
  %883 = vmatprep.subr.bf16.mxu0 0
  %884 = vmatpush1.bf16.msra.mxu0 0
  %885 = vmatprep.subr.bf16.mxu0 0
  %886 = vmatpush1.bf16.msra.mxu0 %v877
  %887 = vmatprep.subr.bf16.mxu0 0
  %888 = vmatpush1.bf16.msra.mxu0 %v863
  %889 = vmatprep.subr.bf16.mxu0 0
  %890 = vmatpush1.bf16.msra.mxu0 %v861
  %891 = vmatprep.subr.bf16.mxu0 0
  %892 = vmatpush1.bf16.msra.mxu0 %v859
  %893 = vmatprep.subr.bf16.mxu0 0
  %894 = vmatpush1.bf16.msra.mxu0 %v857
  %895 = vmatprep.subr.bf16.mxu0 0
  %896 = vmatpush2.bf16.msra.mxu0 0
  %897 = vmatprep.subr.bf16.mxu0 0
  %898 = vmatpush2.bf16.msra.mxu0 0
  %899 = vmatprep.subr.bf16.mxu0 0
  %900 = vmatpush2.bf16.msra.mxu0 0
  %901 = vmatprep.subr.bf16.mxu0 0
  %902 = vmatpush2.bf16.msra.mxu0 0
  %903 = vmatprep.subr.bf16.mxu0 0
  %904 = vmatpush2.bf16.msra.mxu0 0
  %905 = vmatprep.subr.bf16.mxu0 0
  %906 = vmatpush2.bf16.msra.mxu0 0
  %907 = vmatprep.subr.bf16.mxu0 0
  %908 = vmatpush2.bf16.msra.mxu0 0
  %909 = vmatprep.subr.bf16.mxu0 0
  %910 = vmatpush2.bf16.msra.mxu0 0
  %911 = vmatprep.mubr.bf16.mxu0 0
  %912 = vmatmul.mubr.bf16.gmra.mxu0 %v871
  %v913 = vpop.f32.mrf.mxu0
  %v914 = vadd.f32 0.0, %v913
  %v915 = vpop.f32.mrf.mxu0
  %v916 = vpop.f32.mrf.mxu0
  %v917 = vadd.f32 0.0, %v916
  %v918 = vpop.f32.mrf.mxu0
  %919 = vmatprep.mubr.bf16.mxu0 0
  %920 = vmatmul.mubr.bf16.gmra.mxu0 %v874
  %v921 = vpop.f32.mrf.mxu0
  %v922 = vadd.f32 0.0, %v921
  %v923 = vpop.f32.mrf.mxu0
  %v924 = vpop.f32.mrf.mxu0
  %v925 = vadd.f32 0.0, %v924
  %v926 = vpop.f32.mrf.mxu0
  %927 = vdwg.mxu0
  %v928 = vadd.f32 %v837, %v914
  %v929 = vadd.f32 %v838, %v917
  %v930 = vadd.f32 %v839, %v922
  %v931 = vadd.f32 %v840, %v925
  %v932 = vld [vmem:[%s5] sm:$0x1]
  %v934 = vlaneseq
  %v935 = vshrl.u32 %v934, 7
  %v936 = vsub.s32 0, %v935
  %v937 = vrot.slane %v932, %v936
  %v939 = vadd.f32 %v928, %v937
  %v940 = vadd.f32 %v929, %v937
  %v941 = vadd.f32 %v930, %v937
  %v942 = vadd.f32 %v931, %v937
  %v943 = vmax.f32 %v939, 0.0
  %v944 = vmax.f32 %v940, 0.0
  %v945 = vmax.f32 %v941, 0.0
  %v946 = vmax.f32 %v942, 0.0
  %v947 = vpack.c.bf16 %v944, %v943
  %v948 = vpack.c.bf16 %v946, %v945
  %v949 = vld [vmem:[%s7] sm:$0xff]
  %v950 = vld [vmem:[%s7 + $0x8] sm:$0xff]
  %v951 = vld [vmem:[%s7 + $0x10] sm:$0xff]
  %v952 = vld [vmem:[%s7 + $0x18] sm:$0xff]
  %v957 = vunpack.c.l.b16 %v949
  %v958 = vunpack.c.h.b16 %v949
  %v959 = vunpack.c.l.b16 %v950
  %v960 = vunpack.c.h.b16 %v950
  %v961 = vunpack.c.l.b16 %v951
  %v962 = vunpack.c.h.b16 %v951
  %v963 = vunpack.c.l.b16 %v952
  %v964 = vunpack.c.h.b16 %v952
  %v965 = vpack.c.b16 %v959, %v957
  %v966 = vpack.c.b16 %v960, %v958
  %v967 = vpack.c.b16 %v963, %v961
  %v968 = vpack.c.b16 %v964, %v962
  %vm973 = vcmask 261120
  %v975 = vsel %vm973, %v947, 0
  %v978 = vsel %vm973, %v948, 0
  %980 = vmatprep.subr.bf16.mxu0 0
  %981 = vmatpush1.bf16.msra.mxu0 0
  %982 = vmatprep.subr.bf16.mxu0 0
  %983 = vmatpush1.bf16.msra.mxu0 0
  %984 = vmatprep.subr.bf16.mxu0 0
  %985 = vmatpush1.bf16.msra.mxu0 0
  %986 = vmatprep.subr.bf16.mxu0 0
  %987 = vmatpush1.bf16.msra.mxu0 0
  %988 = vmatprep.subr.bf16.mxu0 0
  %989 = vmatpush1.bf16.msra.mxu0 0
  %990 = vmatprep.subr.bf16.mxu0 0
  %991 = vmatpush1.bf16.msra.mxu0 0
  %992 = vmatprep.subr.bf16.mxu0 %v968
  %993 = vmatpush1.bf16.msra.mxu0 %v967
  %994 = vmatprep.subr.bf16.mxu0 %v966
  %995 = vmatpush1.bf16.msra.mxu0 %v965
  %996 = vmatprep.subr.bf16.mxu0 0
  %997 = vmatpush2.bf16.msra.mxu0 0
  %998 = vmatprep.subr.bf16.mxu0 0
  %999 = vmatpush2.bf16.msra.mxu0 0
  %1000 = vmatprep.subr.bf16.mxu0 0
  %1001 = vmatpush2.bf16.msra.mxu0 0
  %1002 = vmatprep.subr.bf16.mxu0 0
  %1003 = vmatpush2.bf16.msra.mxu0 0
  %1004 = vmatprep.subr.bf16.mxu0 0
  %1005 = vmatpush2.bf16.msra.mxu0 0
  %1006 = vmatprep.subr.bf16.mxu0 0
  %1007 = vmatpush2.bf16.msra.mxu0 0
  %1008 = vmatprep.subr.bf16.mxu0 0
  %1009 = vmatpush2.bf16.msra.mxu0 0
  %1010 = vmatprep.subr.bf16.mxu0 0
  %1011 = vmatpush2.bf16.msra.mxu0 0
  %1012 = vmatprep.mubr.bf16.mxu0 0
  %1013 = vmatmul.mubr.bf16.gmra.mxu0 %v975
  %v1014 = vpop.f32.mrf.mxu0
  %v1015 = vadd.f32 0.0, %v1014
  %v1016 = vpop.f32.mrf.mxu0
  %v1017 = vadd.f32 0.0, %v1016
  %v1018 = vpop.f32.mrf.mxu0
  %v1019 = vadd.f32 0.0, %v1018
  %v1020 = vpop.f32.mrf.mxu0
  %v1021 = vadd.f32 0.0, %v1020
  %1022 = vmatprep.mubr.bf16.mxu0 0
  %1023 = vmatmul.mubr.bf16.gmra.mxu0 %v978
  %v1024 = vpop.f32.mrf.mxu0
  %v1025 = vadd.f32 0.0, %v1024
  %v1026 = vpop.f32.mrf.mxu0
  %v1027 = vadd.f32 0.0, %v1026
  %v1028 = vpop.f32.mrf.mxu0
  %v1029 = vadd.f32 0.0, %v1028
  %v1030 = vpop.f32.mrf.mxu0
  %v1031 = vadd.f32 0.0, %v1030
  %1032 = vdwg.mxu0
  %v1033 = vpack.c.bf16 %v1019, %v1015
  %v1034 = vpack.c.bf16 %v1029, %v1025
  %v1035 = vld [vmem:[%s6] sm:$0xf]
  %s1036 = scalar_lea.vmem %s6, 4
  %v1037 = vld [vmem:[%s1036] sm:$0xf]
  %1040 = vrot.lane.b32.xlu0 %v1033, 64
  %v1041 = vpop.permute.xlu0 %1040
  %1042 = vrot.lane.b32.xlu0 %v1034, 64
  %v1043 = vpop.permute.xlu0 %1042
  %v1047 = vsel %vm973, %v1037, 0
  %1049 = vmatprep.subr.bf16.mxu0 0
  %1050 = vmatpush1.bf16.msra.mxu0 0
  %1051 = vmatprep.subr.bf16.mxu0 0
  %1052 = vmatpush1.bf16.msra.mxu0 0
  %1053 = vmatprep.subr.bf16.mxu0 0
  %1054 = vmatpush1.bf16.msra.mxu0 0
  %1055 = vmatprep.subr.bf16.mxu0 0
  %1056 = vmatpush1.bf16.msra.mxu0 0
  %1057 = vmatprep.subr.bf16.mxu0 0
  %1058 = vmatpush1.bf16.msra.mxu0 0
  %1059 = vmatprep.subr.bf16.mxu0 0
  %1060 = vmatpush1.bf16.msra.mxu0 0
  %1061 = vmatprep.subr.bf16.mxu0 0
  %1062 = vmatpush1.bf16.msra.mxu0 %v1043
  %1063 = vmatprep.subr.bf16.mxu0 0
  %1064 = vmatpush1.bf16.msra.mxu0 %v1041
  %1065 = vmatprep.subr.bf16.mxu0 0
  %1066 = vmatpush2.bf16.msra.mxu0 0
  %1067 = vmatprep.subr.bf16.mxu0 0
  %1068 = vmatpush2.bf16.msra.mxu0 0
  %1069 = vmatprep.subr.bf16.mxu0 0
  %1070 = vmatpush2.bf16.msra.mxu0 0
  %1071 = vmatprep.subr.bf16.mxu0 0
  %1072 = vmatpush2.bf16.msra.mxu0 0
  %1073 = vmatprep.subr.bf16.mxu0 0
  %1074 = vmatpush2.bf16.msra.mxu0 0
  %1075 = vmatprep.subr.bf16.mxu0 0
  %1076 = vmatpush2.bf16.msra.mxu0 0
  %1077 = vmatprep.subr.bf16.mxu0 0
  %1078 = vmatpush2.bf16.msra.mxu0 0
  %1079 = vmatprep.subr.bf16.mxu0 0
  %1080 = vmatpush2.bf16.msra.mxu0 0
  %1081 = vmatprep.mubr.bf16.mxu0 0
  %1082 = vmatmul.mubr.bf16.gmra.mxu0 %v1047
  %v1083 = vpop.f32.mrf.mxu0
  %v1084 = vadd.f32 0.0, %v1083
  %v1085 = vpop.f32.mrf.mxu0
  %v1086 = vpop.f32.mrf.mxu0
  %v1087 = vpop.f32.mrf.mxu0
  %1088 = vdwg.mxu0
  %v1090 = vsel %vm973, %v1035, 0
  %1092 = vmatprep.subr.bf16.mxu0 0
  %1093 = vmatpush1.bf16.msra.mxu0 0
  %1094 = vmatprep.subr.bf16.mxu0 0
  %1095 = vmatpush1.bf16.msra.mxu0 0
  %1096 = vmatprep.subr.bf16.mxu0 0
  %1097 = vmatpush1.bf16.msra.mxu0 0
  %1098 = vmatprep.subr.bf16.mxu0 0
  %1099 = vmatpush1.bf16.msra.mxu0 0
  %1100 = vmatprep.subr.bf16.mxu0 0
  %1101 = vmatpush1.bf16.msra.mxu0 0
  %1102 = vmatprep.subr.bf16.mxu0 0
  %1103 = vmatpush1.bf16.msra.mxu0 0
  %1104 = vmatprep.subr.bf16.mxu0 0
  %1105 = vmatpush1.bf16.msra.mxu0 %v1034
  %1106 = vmatprep.subr.bf16.mxu0 0
  %1107 = vmatpush1.bf16.msra.mxu0 %v1033
  %1108 = vmatprep.subr.bf16.mxu0 0
  %1109 = vmatpush2.bf16.msra.mxu0 0
  %1110 = vmatprep.subr.bf16.mxu0 0
  %1111 = vmatpush2.bf16.msra.mxu0 0
  %1112 = vmatprep.subr.bf16.mxu0 0
  %1113 = vmatpush2.bf16.msra.mxu0 0
  %1114 = vmatprep.subr.bf16.mxu0 0
  %1115 = vmatpush2.bf16.msra.mxu0 0
  %1116 = vmatprep.subr.bf16.mxu0 0
  %1117 = vmatpush2.bf16.msra.mxu0 0
  %1118 = vmatprep.subr.bf16.mxu0 0
  %1119 = vmatpush2.bf16.msra.mxu0 0
  %1120 = vmatprep.subr.bf16.mxu0 0
  %1121 = vmatpush2.bf16.msra.mxu0 0
  %1122 = vmatprep.subr.bf16.mxu0 0
  %1123 = vmatpush2.bf16.msra.mxu0 0
  %1124 = vmatprep.mubr.bf16.mxu0 0
  %1125 = vmatmul.mubr.bf16.gmra.mxu0 %v1090
  %v1126 = vpop.f32.mrf.mxu0
  %v1127 = vadd.f32 %v1084, %v1126
  %v1128 = vpop.f32.mrf.mxu0
  %v1129 = vpop.f32.mrf.mxu0
  %v1130 = vpop.f32.mrf.mxu0
  %1131 = vdwg.mxu0
  %v1132 = vpack.c.bf16 %v1021, %v1017
  %v1133 = vpack.c.bf16 %v1031, %v1027
  %s1134 = scalar_lea.vmem %s6, 8
  %v1135 = vld [vmem:[%s1134] sm:$0xf]
  %v1137 = vsel %vm973, %v1135, 0
  %1139 = vmatprep.subr.bf16.mxu0 0
  %1140 = vmatpush1.bf16.msra.mxu0 0
  %1141 = vmatprep.subr.bf16.mxu0 0
  %1142 = vmatpush1.bf16.msra.mxu0 0
  %1143 = vmatprep.subr.bf16.mxu0 0
  %1144 = vmatpush1.bf16.msra.mxu0 0
  %1145 = vmatprep.subr.bf16.mxu0 0
  %1146 = vmatpush1.bf16.msra.mxu0 0
  %1147 = vmatprep.subr.bf16.mxu0 0
  %1148 = vmatpush1.bf16.msra.mxu0 0
  %1149 = vmatprep.subr.bf16.mxu0 0
  %1150 = vmatpush1.bf16.msra.mxu0 0
  %1151 = vmatprep.subr.bf16.mxu0 0
  %1152 = vmatpush1.bf16.msra.mxu0 %v1133
  %1153 = vmatprep.subr.bf16.mxu0 0
  %1154 = vmatpush1.bf16.msra.mxu0 %v1132
  %1155 = vmatprep.subr.bf16.mxu0 0
  %1156 = vmatpush2.bf16.msra.mxu0 0
  %1157 = vmatprep.subr.bf16.mxu0 0
  %1158 = vmatpush2.bf16.msra.mxu0 0
  %1159 = vmatprep.subr.bf16.mxu0 0
  %1160 = vmatpush2.bf16.msra.mxu0 0
  %1161 = vmatprep.subr.bf16.mxu0 0
  %1162 = vmatpush2.bf16.msra.mxu0 0
  %1163 = vmatprep.subr.bf16.mxu0 0
  %1164 = vmatpush2.bf16.msra.mxu0 0
  %1165 = vmatprep.subr.bf16.mxu0 0
  %1166 = vmatpush2.bf16.msra.mxu0 0
  %1167 = vmatprep.subr.bf16.mxu0 0
  %1168 = vmatpush2.bf16.msra.mxu0 0
  %1169 = vmatprep.subr.bf16.mxu0 0
  %1170 = vmatpush2.bf16.msra.mxu0 0
  %1171 = vmatprep.mubr.bf16.mxu0 0
  %1172 = vmatmul.mubr.bf16.gmra.mxu0 %v1137
  %v1173 = vpop.f32.mrf.mxu0
  %v1174 = vadd.f32 0.0, %v1173
  %v1175 = vpop.f32.mrf.mxu0
  %v1176 = vpop.f32.mrf.mxu0
  %v1177 = vpop.f32.mrf.mxu0
  %1178 = vdwg.mxu0
  %v1179 = vadd.f32 %v1127, %v1174
  %s1180 = scalar_lea.vmem %s6, 12
  %v1181 = vld [vmem:[%s1180] sm:$0xf]
  %1184 = vrot.lane.b32.xlu0 %v1132, 64
  %v1185 = vpop.permute.xlu0 %1184
  %1186 = vrot.lane.b32.xlu0 %v1133, 64
  %v1187 = vpop.permute.xlu0 %1186
  %v1191 = vsel %vm973, %v1181, 0
  %1193 = vmatprep.subr.bf16.mxu0 0
  %1194 = vmatpush1.bf16.msra.mxu0 0
  %1195 = vmatprep.subr.bf16.mxu0 0
  %1196 = vmatpush1.bf16.msra.mxu0 0
  %1197 = vmatprep.subr.bf16.mxu0 0
  %1198 = vmatpush1.bf16.msra.mxu0 0
  %1199 = vmatprep.subr.bf16.mxu0 0
  %1200 = vmatpush1.bf16.msra.mxu0 0
  %1201 = vmatprep.subr.bf16.mxu0 0
  %1202 = vmatpush1.bf16.msra.mxu0 0
  %1203 = vmatprep.subr.bf16.mxu0 0
  %1204 = vmatpush1.bf16.msra.mxu0 0
  %1205 = vmatprep.subr.bf16.mxu0 0
  %1206 = vmatpush1.bf16.msra.mxu0 %v1187
  %1207 = vmatprep.subr.bf16.mxu0 0
  %1208 = vmatpush1.bf16.msra.mxu0 %v1185
  %1209 = vmatprep.subr.bf16.mxu0 0
  %1210 = vmatpush2.bf16.msra.mxu0 0
  %1211 = vmatprep.subr.bf16.mxu0 0
  %1212 = vmatpush2.bf16.msra.mxu0 0
  %1213 = vmatprep.subr.bf16.mxu0 0
  %1214 = vmatpush2.bf16.msra.mxu0 0
  %1215 = vmatprep.subr.bf16.mxu0 0
  %1216 = vmatpush2.bf16.msra.mxu0 0
  %1217 = vmatprep.subr.bf16.mxu0 0
  %1218 = vmatpush2.bf16.msra.mxu0 0
  %1219 = vmatprep.subr.bf16.mxu0 0
  %1220 = vmatpush2.bf16.msra.mxu0 0
  %1221 = vmatprep.subr.bf16.mxu0 0
  %1222 = vmatpush2.bf16.msra.mxu0 0
  %1223 = vmatprep.subr.bf16.mxu0 0
  %1224 = vmatpush2.bf16.msra.mxu0 0
  %1225 = vmatprep.mubr.bf16.mxu0 0
  %1226 = vmatmul.mubr.bf16.gmra.mxu0 %v1191
  %v1227 = vpop.f32.mrf.mxu0
  %v1228 = vadd.f32 0.0, %v1227
  %v1229 = vpop.f32.mrf.mxu0
  %v1230 = vpop.f32.mrf.mxu0
  %v1231 = vpop.f32.mrf.mxu0
  %1232 = vdwg.mxu0
  %v1233 = vadd.f32 %v1179, %v1228
  %v1234 = vld [vmem:[%s8] sm:$0x1]
  %v1236 = vlaneseq
  %v1237 = vshrl.u32 %v1236, 7
  %v1238 = vsub.s32 0, %v1237
  %v1239 = vrot.slane %v1234, %v1238
  %v1241 = vadd.f32 %v1233, %v1239
  %v1242 = vmax.f32 %v1241, 0.0
  %v1243 = vpack.c.bf16 %v1242, %v1242
  %v1244 = vld [vmem:[%s9] sm:$0xf]
  %v1245 = vld [vmem:[%s9 + $0x4] sm:$0xf]
  %v1246 = vld [vmem:[%s9 + $0x8] sm:$0xf]
  %v1247 = vld [vmem:[%s9 + $0xc] sm:$0xf]
  %v1248 = vld [vmem:[%s9 + $0x10] sm:$0xf]
  %v1249 = vld [vmem:[%s9 + $0x14] sm:$0xf]
  %v1250 = vld [vmem:[%s9 + $0x18] sm:$0xf]
  %v1251 = vld [vmem:[%s9 + $0x1c] sm:$0xf]
  %v1252 = vld [vmem:[%s10] sm:$0x1]
  %v1254 = vlaneseq
  %v1255 = vshrl.u32 %v1254, 7
  %v1256 = vsub.s32 0, %v1255
  %v1257 = vrot.slane %v1252, %v1256
  %v1267 = vunpack.c.l.b16 %v1244
  %v1268 = vunpack.c.l.b16 %v1245
  %v1269 = vunpack.c.l.b16 %v1246
  %v1270 = vunpack.c.l.b16 %v1247
  %v1271 = vunpack.c.l.b16 %v1248
  %v1272 = vunpack.c.l.b16 %v1249
  %v1273 = vunpack.c.l.b16 %v1250
  %v1274 = vunpack.c.l.b16 %v1251
  %v1275 = vpack.c.b16 %v1268, %v1267
  %v1276 = vpack.c.b16 %v1270, %v1269
  %v1277 = vpack.c.b16 %v1272, %v1271
  %v1278 = vpack.c.b16 %v1274, %v1273
  %vm1283 = vcmask 523264
  %v1285 = vsel %vm1283, %v1243, 0
  %1287 = vmatprep.subr.bf16.mxu0 0
  %1288 = vmatpush1.bf16.msra.mxu0 0
  %1289 = vmatprep.subr.bf16.mxu0 0
  %1290 = vmatpush1.bf16.msra.mxu0 0
  %1291 = vmatprep.subr.bf16.mxu0 0
  %1292 = vmatpush1.bf16.msra.mxu0 0
  %1293 = vmatprep.subr.bf16.mxu0 0
  %1294 = vmatpush1.bf16.msra.mxu0 0
  %1295 = vmatprep.subr.bf16.mxu0 0
  %1296 = vmatpush1.bf16.msra.mxu0 %v1278
  %1297 = vmatprep.subr.bf16.mxu0 0
  %1298 = vmatpush1.bf16.msra.mxu0 %v1277
  %1299 = vmatprep.subr.bf16.mxu0 0
  %1300 = vmatpush1.bf16.msra.mxu0 %v1276
  %1301 = vmatprep.subr.bf16.mxu0 0
  %1302 = vmatpush1.bf16.msra.mxu0 %v1275
  %1303 = vmatprep.subr.bf16.mxu0 0
  %1304 = vmatpush2.bf16.msra.mxu0 0
  %1305 = vmatprep.subr.bf16.mxu0 0
  %1306 = vmatpush2.bf16.msra.mxu0 0
  %1307 = vmatprep.subr.bf16.mxu0 0
  %1308 = vmatpush2.bf16.msra.mxu0 0
  %1309 = vmatprep.subr.bf16.mxu0 0
  %1310 = vmatpush2.bf16.msra.mxu0 0
  %1311 = vmatprep.subr.bf16.mxu0 0
  %1312 = vmatpush2.bf16.msra.mxu0 0
  %1313 = vmatprep.subr.bf16.mxu0 0
  %1314 = vmatpush2.bf16.msra.mxu0 0
  %1315 = vmatprep.subr.bf16.mxu0 0
  %1316 = vmatpush2.bf16.msra.mxu0 0
  %1317 = vmatprep.subr.bf16.mxu0 0
  %1318 = vmatpush2.bf16.msra.mxu0 0
  %1319 = vmatprep.mubr.bf16.mxu0 0
  %1320 = vmatmul.mubr.bf16.gmra.mxu0 %v1285
  %v1321 = vpop.f32.mrf.mxu0
  %v1322 = vadd.f32 %v1257, %v1321
  %v1323 = vpop.f32.mrf.mxu0
  %v1324 = vpop.f32.mrf.mxu0
  %v1325 = vpop.f32.mrf.mxu0
  %1326 = vdwg.mxu0
  %1327 = vst [vmem:[%s11] sm:$0xff] %v1322
  // Predicated region
  $region46: #{forward.1} parent=0 // pred_check
    _
  $region47: #{forward.1} parent=0 // pred_check_branch
    %1329 = sbr.rel (0) target = $region49
  $region48: #{forward.1} parent=0 // pred_region
    _
  $region49: #{forward.1} parent=0 // pred_fallthru
    _
  // Predicated region
  $region50: #{forward.1} parent=0 // pred_check
    _
  $region51: #{forward.1} parent=0 // pred_check_branch
    %1331 = sbr.rel (0) target = $region53
  $region52: #{forward.1} parent=0 // pred_region
    _
  $region53: #{forward.1} parent=0 // pred_fallthru
    _

</llo_original>
